<compile_context>
chip_gen: v7x
topology: tpu7x:2x2x1
jax: 0.10.0
libtpu: 0.0.40
codegen_flags: <defaults>
</compile_context>

<pallas_src>
import functools
import math

import jax
import jax.numpy as jnp
from jax.experimental import pallas as pl
from jax.experimental.pallas import tpu as pltpu


def visu_shrink(sigma, M, num_layers, alpha=0.02, c=0.6):
    thr_visu = sigma * math.sqrt(2.0 * math.log(M))
    return jnp.asarray([thr_visu * alpha * (c ** i) for i in range(num_layers)],
                       dtype=jnp.float32)


def _soft_thr(x, theta):
    # soft_thr(x, t) = relu(x - t) - relu(-x - t) == x - clip(x, -t, t)
    # (3 VPU ops/element instead of ~6 for the two-ReLU form).
    return x - jnp.clip(x, -theta, theta)


def _lista_kernel(num_iter, mxu_dtype, thr_ref, y_ref, wt_ref, st_ref, out_ref,
                  wy_ref, d_ref):
    # W(y): computed once per batch tile (MXU), staged in VMEM scratch so it
    # is not held in vregs across iterations.
    wy_ref[...] = jnp.dot(y_ref[...], wt_ref[...],
                          preferred_element_type=jnp.float32)

    # ---- iteration 0 (peeled): d_0 == 0, so S(d_0) == 0 exactly -----------
    d0 = _soft_thr(wy_ref[...], thr_ref[0])
    out_ref[0] = d0.astype(out_ref.dtype)
    d_ref[...] = d0.astype(mxu_dtype)

    # ---- remaining iterations (static trip count). The running iterate d
    # round-trips through the small VMEM scratch each iteration, so live
    # ranges stay bounded per iteration regardless of the batch tile size.
    for i in range(1, num_iter):
        pre = wy_ref[...] + jnp.dot(d_ref[...], st_ref[...],
                                    preferred_element_type=jnp.float32)
        d = _soft_thr(pre, thr_ref[i])
        out_ref[i] = d.astype(out_ref.dtype)
        if i + 1 < num_iter:
            d_ref[...] = d.astype(mxu_dtype)


def _sublane_multiple(dtype):
    return {4: 8, 2: 16, 1: 32}.get(jnp.dtype(dtype).itemsize, 8)


def _vmem_capacity_bytes():
    cap = 64 << 20  # conservative default: v7x per-TensorCore VMEM
    try:
        info = pltpu.get_tpu_info()
        cap = int(getattr(info, "vmem_capacity_bytes", cap))
    except Exception:
        pass
    return cap


def lista_forward(y, w_weight, s_weight, thr, *, block_b=256,
                  mxu_dtype=jnp.bfloat16, out_dtype=jnp.bfloat16):
    """y: (B, m), w_weight: (n, m), s_weight: (n, n), thr: (numIter,) float32.

    Returns (numIter, B, n) in `out_dtype` — the stacked per-iteration sparse
    codes [d_1, ..., d_numIter], matching the PyTorch forward's returned list.
    Use mxu_dtype=out_dtype=jnp.float32 for strict accuracy.
    """
    B, m = y.shape
    n = s_weight.shape[0]
    num_iter = int(thr.shape[0])

    mxu_item = jnp.dtype(mxu_dtype).itemsize
    out_item = jnp.dtype(out_dtype).itemsize

    # Pre-transpose so the kernel does plain row-major matmuls on the MXU.
    w_t = w_weight.T.astype(mxu_dtype)   # (m, n)
    s_t = s_weight.T.astype(mxu_dtype)   # (n, n)
    y_in = y.astype(mxu_dtype)
    thr = thr.astype(jnp.float32)

    # ---- batch tile size, derived from the per-device VMEM budget ---------
    vmem_cap = _vmem_capacity_bytes()
    budget = int(0.75 * vmem_cap)                  # headroom for compiler scratch
    weight_bytes = (m * n + n * n) * mxu_item      # W.T + S.T, single-buffered
    per_row = (2 * m * mxu_item                    # y tile (double-buffered)
               + 2 * num_iter * n * out_item       # out tile (double-buffered)
               + n * (4 + mxu_item))               # wy + d VMEM scratch
    avail = budget - weight_bytes
    tb_max = max(8, avail // per_row) if avail > 0 else 8

    mult = max(_sublane_multiple(mxu_dtype), _sublane_multiple(out_dtype))
    tb = min(B, block_b, int(tb_max))
    if tb < B:
        tb = max(mult, (tb // mult) * mult)
    # v7x megacore: ensure >=2 batch tiles so both TensorCores get work
    # (no effect on single-TC v5e/v6e).
    if B > mult and pl.cdiv(B, tb) < 2:
        half = ((-(-B // 2)) + mult - 1) // mult * mult
        tb = min(tb, half)
    grid = (pl.cdiv(B, tb),)

    # ---- scoped VMEM limit: never ask for more than the device has --------
    vmem_est = weight_bytes + tb * per_row
    compiler_kwargs = dict(dimension_semantics=("parallel",))
    if vmem_est > (30 << 20):
        compiler_kwargs["vmem_limit_bytes"] = int(
            min(vmem_est + (4 << 20), int(0.9 * vmem_cap)))

    kernel = functools.partial(_lista_kernel, num_iter, mxu_dtype)
    out_shape = jax.ShapeDtypeStruct((num_iter, B, n), out_dtype)

    def build(single_buffer_weights):
        wkw = ({"pipeline_mode": pl.Buffered(1)} if single_buffer_weights
               else {})
        grid_spec = pltpu.PrefetchScalarGridSpec(
            num_scalar_prefetch=0,
            grid=grid,
            in_specs=[
                pl.BlockSpec(memory_space=pltpu.SMEM),            # thr (scalars)
                pl.BlockSpec((tb, m), lambda b: (b, 0)),          # y batch tile
                pl.BlockSpec((m, n), lambda b: (0, 0), **wkw),    # W.T (resident)
                pl.BlockSpec((n, n), lambda b: (0, 0), **wkw),    # S.T (resident)
            ],
            out_specs=pl.BlockSpec((num_iter, tb, n), lambda b: (0, b, 0)),
            scratch_shapes=[
                pltpu.VMEM((tb, n), jnp.float32),   # wy = y @ W.T (per tile)
                pltpu.VMEM((tb, n), mxu_dtype),     # running iterate d
            ],
        )
        return pl.pallas_call(
            kernel,
            out_shape=out_shape,
            grid_spec=grid_spec,
            compiler_params=pltpu.CompilerParams(**compiler_kwargs),
        )

    try:
        # Invariant weights: single pipeline buffer (constant index_map).
        return build(True)(thr, y_in, w_t, s_t)
    except Exception:
        # Fallback if pipeline_mode=Buffered(1) is unsupported in this jax.
        return build(False)(thr, y_in, w_t, s_t)


def lista_reference(y, w_weight, s_weight, thr):
    num_iter = int(thr.shape[0])
    d = jnp.zeros((y.shape[0], s_weight.shape[0]), jnp.float32)
    outs = []
    wy = y @ w_weight.T
    for t in range(num_iter):
        pre = wy + d @ s_weight.T
        th = thr[t]
        d = jnp.maximum(pre - th, 0.0) - jnp.maximum(-pre - th, 0.0)
        outs.append(d)
    return jnp.stack(outs, axis=0)


if __name__ == "__main__":
    # Small deterministic problem: m measurements, n-dim sparse code.
    B, m, n, num_iter = 8, 128, 128, 4

    key = jax.random.PRNGKey(0)
    k_a, k_y = jax.random.split(key)

    # Dictionary A: (m, n), deterministic.
    A = jax.random.normal(k_a, (m, n), dtype=jnp.float32) / jnp.sqrt(m)
    # Lipschitz constant L = largest eigenvalue of A.T A.
    L = float(jnp.max(jnp.linalg.eigvalsh(A.T @ A))) * 1.001

    # weights_init() semantics.
    S_weight = jnp.eye(n, dtype=jnp.float32) - (1.0 / L) * (A.T @ A)  # (n, n)
    W_weight = (1.0 / L) * A.T                                        # (n, m)
    thr = visu_shrink(0.057, m, num_iter, alpha=0.13)

    y = jax.random.normal(k_y, (B, m), dtype=jnp.float32)

    ref = lista_reference(y, W_weight, S_weight, thr)

    # Strict-accuracy path: f32 MXU inputs + f32 output.
    out_f32 = jax.block_until_ready(
        lista_forward(y, W_weight, S_weight, thr,
                      mxu_dtype=jnp.float32, out_dtype=jnp.float32))
    assert out_f32.shape == (num_iter, B, n)
    assert jnp.allclose(out_f32, ref, atol=1e-4, rtol=1e-4), "f32 mismatch"

    # Fast default path: bf16 MXU inputs (f32 accumulation) + bf16 output.
    out_fast = jax.block_until_ready(lista_forward(y, W_weight, S_weight, thr))
    assert out_fast.dtype == jnp.bfloat16
    assert float(jnp.max(jnp.abs(out_fast.astype(jnp.float32) - ref))) < 5e-2, \
        "bf16 mismatch"

    # Partial last batch tile (B not a multiple of tb): padded rows must not
    # contaminate valid rows.
    B2 = 12
    y2 = jax.random.normal(jax.random.PRNGKey(1), (B2, m), dtype=jnp.float32)
    ref2 = lista_reference(y2, W_weight, S_weight, thr)
    out2 = jax.block_until_ready(
        lista_forward(y2, W_weight, S_weight, thr, block_b=8,
                      mxu_dtype=jnp.float32, out_dtype=jnp.float32))
    assert out2.shape == (num_iter, B2, n)
    assert jnp.allclose(out2, ref2, atol=1e-4, rtol=1e-4), "partial-tile mismatch"

    print("KERNEL_OK")
</pallas_src>

<mosaic_0001>
module attributes {stable_mosaic.version = 11 : i64} {
  func.func @_lista_kernel(%arg0: i32, %arg1: memref<4xf32, #tpu.memory_space<smem>>, %arg2: memref<8x128xf32, #tpu.memory_space<vmem>>, %arg3: memref<128x128xf32, #tpu.memory_space<vmem>>, %arg4: memref<128x128xf32, #tpu.memory_space<vmem>>, %arg5: memref<4x8x128xf32, #tpu.memory_space<vmem>>, %arg6: memref<8x128xf32, #tpu.memory_space<vmem>>, %arg7: memref<8x128xf32, #tpu.memory_space<vmem>>) attributes {dimension_semantics = [#tpu.dimension_semantics<parallel>], iteration_bounds = array<i64: 1>, scalar_prefetch = 0 : i64, scratch_operands = 2 : i64, tpu.core_type = #tpu.core_type<tc>, window_params = [{transform_indices = @transform_0, window_bounds = array<i64: 4>}, {transform_indices = @transform_1, window_bounds = array<i64: 8, 128>}, {pipeline_mode = #tpu.pipeline_mode<synchronous>, transform_indices = @transform_2, window_bounds = array<i64: 128, 128>}, {pipeline_mode = #tpu.pipeline_mode<synchronous>, transform_indices = @transform_3, window_bounds = array<i64: 128, 128>}, {transform_indices = @transform_4, window_bounds = array<i64: 4, 8, 128>}]} {
    %c0 = arith.constant 0 : index
    %c0_0 = arith.constant 0 : index
    %0 = vector.load %arg2[%c0, %c0_0] : memref<8x128xf32, #tpu.memory_space<vmem>>, vector<8x128xf32>
    %c0_1 = arith.constant 0 : index
    %c0_2 = arith.constant 0 : index
    %1 = vector.load %arg3[%c0_1, %c0_2] : memref<128x128xf32, #tpu.memory_space<vmem>>, vector<128x128xf32>
    %cst = arith.constant dense<0.000000e+00> : vector<8x128xf32>
    %2 = tpu.matmul %0, %1, %cst {dimension_numbers = #tpu.dot_dimension_numbers<[1], [0], [0], [1], [0, 0, 1, 1], [], []>} : vector<8x128xf32>, vector<128x128xf32>, vector<8x128xf32> -> vector<8x128xf32>
    %c0_3 = arith.constant 0 : index
    %c0_4 = arith.constant 0 : index
    %3 = vector.load %arg6[%c0_3, %c0_4] : memref<8x128xf32, #tpu.memory_space<vmem>>, vector<8x128xf32>
    tpu.vector_store %arg6[%c0_3, %c0_4], %2 {strides = array<i32>} : memref<8x128xf32, #tpu.memory_space<vmem>>, vector<8x128xf32>,
    %c0_5 = arith.constant 0 : index
    %c0_6 = arith.constant 0 : index
    %4 = vector.load %arg6[%c0_5, %c0_6] : memref<8x128xf32, #tpu.memory_space<vmem>>, vector<8x128xf32>
    %c0_7 = arith.constant 0 : index
    %5 = memref.load %arg1[%c0_7] : memref<4xf32, #tpu.memory_space<smem>>
    %cst_8 = arith.constant 0.000000e+00 : f32
    %6 = arith.subf %cst_8, %5 : f32
    %7 = vector.broadcast %6 : f32 to vector<8x128xf32>
    %8 = arith.maximumf %7, %4 : vector<8x128xf32>
    %9 = vector.broadcast %5 : f32 to vector<8x128xf32>
    %10 = arith.minimumf %9, %8 : vector<8x128xf32>
    %11 = arith.subf %4, %10 : vector<8x128xf32>
    %c0_9 = arith.constant 0 : index
    %c0_10 = arith.constant 0 : index
    %c0_11 = arith.constant 0 : index
    %12 = vector.load %arg5[%c0_9, %c0_10, %c0_11] : memref<4x8x128xf32, #tpu.memory_space<vmem>>, vector<1x8x128xf32>
    %13 = vector.shape_cast %12 : vector<1x8x128xf32> to vector<8x128xf32>
    %14 = vector.shape_cast %11 : vector<8x128xf32> to vector<1x8x128xf32>
    tpu.vector_store %arg5[%c0_9, %c0_10, %c0_11], %14 {strides = array<i32>} : memref<4x8x128xf32, #tpu.memory_space<vmem>>, vector<1x8x128xf32>,
    %c0_12 = arith.constant 0 : index
    %c0_13 = arith.constant 0 : index
    %15 = vector.load %arg7[%c0_12, %c0_13] : memref<8x128xf32, #tpu.memory_space<vmem>>, vector<8x128xf32>
    tpu.vector_store %arg7[%c0_12, %c0_13], %11 {strides = array<i32>} : memref<8x128xf32, #tpu.memory_space<vmem>>, vector<8x128xf32>,
    %c0_14 = arith.constant 0 : index
    %c0_15 = arith.constant 0 : index
    %16 = vector.load %arg6[%c0_14, %c0_15] : memref<8x128xf32, #tpu.memory_space<vmem>>, vector<8x128xf32>
    %c0_16 = arith.constant 0 : index
    %c0_17 = arith.constant 0 : index
    %17 = vector.load %arg7[%c0_16, %c0_17] : memref<8x128xf32, #tpu.memory_space<vmem>>, vector<8x128xf32>
    %c0_18 = arith.constant 0 : index
    %c0_19 = arith.constant 0 : index
    %18 = vector.load %arg4[%c0_18, %c0_19] : memref<128x128xf32, #tpu.memory_space<vmem>>, vector<128x128xf32>
    %cst_20 = arith.constant dense<0.000000e+00> : vector<8x128xf32>
    %19 = tpu.matmul %17, %18, %cst_20 {dimension_numbers = #tpu.dot_dimension_numbers<[1], [0], [0], [1], [0, 0, 1, 1], [], []>} : vector<8x128xf32>, vector<128x128xf32>, vector<8x128xf32> -> vector<8x128xf32>
    %20 = arith.addf %16, %19 : vector<8x128xf32>
    %c1 = arith.constant 1 : index
    %21 = memref.load %arg1[%c1] : memref<4xf32, #tpu.memory_space<smem>>
    %cst_21 = arith.constant 0.000000e+00 : f32
    %22 = arith.subf %cst_21, %21 : f32
    %23 = vector.broadcast %22 : f32 to vector<8x128xf32>
    %24 = arith.maximumf %23, %20 : vector<8x128xf32>
    %25 = vector.broadcast %21 : f32 to vector<8x128xf32>
    %26 = arith.minimumf %25, %24 : vector<8x128xf32>
    %27 = arith.subf %20, %26 : vector<8x128xf32>
    %c1_22 = arith.constant 1 : index
    %c0_23 = arith.constant 0 : index
    %c0_24 = arith.constant 0 : index
    %28 = vector.load %arg5[%c1_22, %c0_23, %c0_24] : memref<4x8x128xf32, #tpu.memory_space<vmem>>, vector<1x8x128xf32>
    %29 = vector.shape_cast %28 : vector<1x8x128xf32> to vector<8x128xf32>
    %30 = vector.shape_cast %27 : vector<8x128xf32> to vector<1x8x128xf32>
    tpu.vector_store %arg5[%c1_22, %c0_23, %c0_24], %30 {strides = array<i32>} : memref<4x8x128xf32, #tpu.memory_space<vmem>>, vector<1x8x128xf32>,
    %c0_25 = arith.constant 0 : index
    %c0_26 = arith.constant 0 : index
    %31 = vector.load %arg7[%c0_25, %c0_26] : memref<8x128xf32, #tpu.memory_space<vmem>>, vector<8x128xf32>
    tpu.vector_store %arg7[%c0_25, %c0_26], %27 {strides = array<i32>} : memref<8x128xf32, #tpu.memory_space<vmem>>, vector<8x128xf32>,
    %c0_27 = arith.constant 0 : index
    %c0_28 = arith.constant 0 : index
    %32 = vector.load %arg6[%c0_27, %c0_28] : memref<8x128xf32, #tpu.memory_space<vmem>>, vector<8x128xf32>
    %c0_29 = arith.constant 0 : index
    %c0_30 = arith.constant 0 : index
    %33 = vector.load %arg7[%c0_29, %c0_30] : memref<8x128xf32, #tpu.memory_space<vmem>>, vector<8x128xf32>
    %c0_31 = arith.constant 0 : index
    %c0_32 = arith.constant 0 : index
    %34 = vector.load %arg4[%c0_31, %c0_32] : memref<128x128xf32, #tpu.memory_space<vmem>>, vector<128x128xf32>
    %cst_33 = arith.constant dense<0.000000e+00> : vector<8x128xf32>
    %35 = tpu.matmul %33, %34, %cst_33 {dimension_numbers = #tpu.dot_dimension_numbers<[1], [0], [0], [1], [0, 0, 1, 1], [], []>} : vector<8x128xf32>, vector<128x128xf32>, vector<8x128xf32> -> vector<8x128xf32>
    %36 = arith.addf %32, %35 : vector<8x128xf32>
    %c2 = arith.constant 2 : index
    %37 = memref.load %arg1[%c2] : memref<4xf32, #tpu.memory_space<smem>>
    %cst_34 = arith.constant 0.000000e+00 : f32
    %38 = arith.subf %cst_34, %37 : f32
    %39 = vector.broadcast %38 : f32 to vector<8x128xf32>
    %40 = arith.maximumf %39, %36 : vector<8x128xf32>
    %41 = vector.broadcast %37 : f32 to vector<8x128xf32>
    %42 = arith.minimumf %41, %40 : vector<8x128xf32>
    %43 = arith.subf %36, %42 : vector<8x128xf32>
    %c2_35 = arith.constant 2 : index
    %c0_36 = arith.constant 0 : index
    %c0_37 = arith.constant 0 : index
    %44 = vector.load %arg5[%c2_35, %c0_36, %c0_37] : memref<4x8x128xf32, #tpu.memory_space<vmem>>, vector<1x8x128xf32>
    %45 = vector.shape_cast %44 : vector<1x8x128xf32> to vector<8x128xf32>
    %46 = vector.shape_cast %43 : vector<8x128xf32> to vector<1x8x128xf32>
    tpu.vector_store %arg5[%c2_35, %c0_36, %c0_37], %46 {strides = array<i32>} : memref<4x8x128xf32, #tpu.memory_space<vmem>>, vector<1x8x128xf32>,
    %c0_38 = arith.constant 0 : index
    %c0_39 = arith.constant 0 : index
    %47 = vector.load %arg7[%c0_38, %c0_39] : memref<8x128xf32, #tpu.memory_space<vmem>>, vector<8x128xf32>
    tpu.vector_store %arg7[%c0_38, %c0_39], %43 {strides = array<i32>} : memref<8x128xf32, #tpu.memory_space<vmem>>, vector<8x128xf32>,
    %c0_40 = arith.constant 0 : index
    %c0_41 = arith.constant 0 : index
    %48 = vector.load %arg6[%c0_40, %c0_41] : memref<8x128xf32, #tpu.memory_space<vmem>>, vector<8x128xf32>
    %c0_42 = arith.constant 0 : index
    %c0_43 = arith.constant 0 : index
    %49 = vector.load %arg7[%c0_42, %c0_43] : memref<8x128xf32, #tpu.memory_space<vmem>>, vector<8x128xf32>
    %c0_44 = arith.constant 0 : index
    %c0_45 = arith.constant 0 : index
    %50 = vector.load %arg4[%c0_44, %c0_45] : memref<128x128xf32, #tpu.memory_space<vmem>>, vector<128x128xf32>
    %cst_46 = arith.constant dense<0.000000e+00> : vector<8x128xf32>
    %51 = tpu.matmul %49, %50, %cst_46 {dimension_numbers = #tpu.dot_dimension_numbers<[1], [0], [0], [1], [0, 0, 1, 1], [], []>} : vector<8x128xf32>, vector<128x128xf32>, vector<8x128xf32> -> vector<8x128xf32>
    %52 = arith.addf %48, %51 : vector<8x128xf32>
    %c3 = arith.constant 3 : index
    %53 = memref.load %arg1[%c3] : memref<4xf32, #tpu.memory_space<smem>>
    %cst_47 = arith.constant 0.000000e+00 : f32
    %54 = arith.subf %cst_47, %53 : f32
    %55 = vector.broadcast %54 : f32 to vector<8x128xf32>
    %56 = arith.maximumf %55, %52 : vector<8x128xf32>
    %57 = vector.broadcast %53 : f32 to vector<8x128xf32>
    %58 = arith.minimumf %57, %56 : vector<8x128xf32>
    %59 = arith.subf %52, %58 : vector<8x128xf32>
    %c3_48 = arith.constant 3 : index
    %c0_49 = arith.constant 0 : index
    %c0_50 = arith.constant 0 : index
    %60 = vector.load %arg5[%c3_48, %c0_49, %c0_50] : memref<4x8x128xf32, #tpu.memory_space<vmem>>, vector<1x8x128xf32>
    %61 = vector.shape_cast %60 : vector<1x8x128xf32> to vector<8x128xf32>
    %62 = vector.shape_cast %59 : vector<8x128xf32> to vector<1x8x128xf32>
    tpu.vector_store %arg5[%c3_48, %c0_49, %c0_50], %62 {strides = array<i32>} : memref<4x8x128xf32, #tpu.memory_space<vmem>>, vector<1x8x128xf32>,
    return
  }
  func.func @transform_0(%arg0: i32) -> i32 {
    %c0_i32 = arith.constant 0 : i32
    %c0_i32_0 = arith.constant 0 : i32
    return %c0_i32 : i32
  }
  func.func @transform_1(%arg0: i32) -> (i32, i32) {
    %c0_i32 = arith.constant 0 : i32
    %c0_i32_0 = arith.constant 0 : i32
    return %arg0, %c0_i32 : i32, i32
  }
  func.func @transform_2(%arg0: i32) -> (i32, i32) {
    %c0_i32 = arith.constant 0 : i32
    %c0_i32_0 = arith.constant 0 : i32
    %c0_i32_1 = arith.constant 0 : i32
    return %c0_i32, %c0_i32_0 : i32, i32
  }
  func.func @transform_3(%arg0: i32) -> (i32, i32) {
    %c0_i32 = arith.constant 0 : i32
    %c0_i32_0 = arith.constant 0 : i32
    %c0_i32_1 = arith.constant 0 : i32
    return %c0_i32, %c0_i32_0 : i32, i32
  }
  func.func @transform_4(%arg0: i32) -> (i32, i32, i32) {
    %c0_i32 = arith.constant 0 : i32
    %c0_i32_0 = arith.constant 0 : i32
    %c0_i32_1 = arith.constant 0 : i32
    return %c0_i32, %arg0, %c0_i32_0 : i32, i32, i32
  }
}

module attributes {stable_mosaic.version = 11 : i64} {
  func.func @_lista_kernel(%arg0: i32, %arg1: memref<4xf32, #tpu.memory_space<smem>>, %arg2: memref<8x128xf32, #tpu.memory_space<vmem>>, %arg3: memref<128x128xf32, #tpu.memory_space<vmem>>, %arg4: memref<128x128xf32, #tpu.memory_space<vmem>>, %arg5: memref<4x8x128xf32, #tpu.memory_space<vmem>>, %arg6: memref<8x128xf32, #tpu.memory_space<vmem>>, %arg7: memref<8x128xf32, #tpu.memory_space<vmem>>) attributes {dimension_semantics = [#tpu.dimension_semantics<parallel>], iteration_bounds = array<i64: 1>, scalar_prefetch = 0 : i64, scratch_operands = 2 : i64, tpu.core_type = #tpu.core_type<tc>, window_params = [{transform_indices = @transform_0, window_bounds = array<i64: 4>}, {transform_indices = @transform_1, window_bounds = array<i64: 8, 128>}, {pipeline_mode = #tpu.pipeline_mode<synchronous>, transform_indices = @transform_2, window_bounds = array<i64: 128, 128>}, {pipeline_mode = #tpu.pipeline_mode<synchronous>, transform_indices = @transform_3, window_bounds = array<i64: 128, 128>}, {transform_indices = @transform_4, window_bounds = array<i64: 4, 8, 128>}]} {
    %c0 = arith.constant 0 : index
    %c0_0 = arith.constant 0 : index
    %0 = vector.load %arg2[%c0, %c0_0] : memref<8x128xf32, #tpu.memory_space<vmem>>, vector<8x128xf32>
    %c0_1 = arith.constant 0 : index
    %c0_2 = arith.constant 0 : index
    %1 = vector.load %arg3[%c0_1, %c0_2] : memref<128x128xf32, #tpu.memory_space<vmem>>, vector<128x128xf32>
    %cst = arith.constant dense<0.000000e+00> : vector<8x128xf32>
    %2 = tpu.matmul %0, %1, %cst {dimension_numbers = #tpu.dot_dimension_numbers<[1], [0], [0], [1], [0, 0, 1, 1], [], []>} : vector<8x128xf32>, vector<128x128xf32>, vector<8x128xf32> -> vector<8x128xf32>
    %c0_3 = arith.constant 0 : index
    %c0_4 = arith.constant 0 : index
    %3 = vector.load %arg6[%c0_3, %c0_4] : memref<8x128xf32, #tpu.memory_space<vmem>>, vector<8x128xf32>
    tpu.vector_store %arg6[%c0_3, %c0_4], %2 {strides = array<i32>} : memref<8x128xf32, #tpu.memory_space<vmem>>, vector<8x128xf32>,
    %c0_5 = arith.constant 0 : index
    %c0_6 = arith.constant 0 : index
    %4 = vector.load %arg6[%c0_5, %c0_6] : memref<8x128xf32, #tpu.memory_space<vmem>>, vector<8x128xf32>
    %c0_7 = arith.constant 0 : index
    %5 = memref.load %arg1[%c0_7] : memref<4xf32, #tpu.memory_space<smem>>
    %cst_8 = arith.constant 0.000000e+00 : f32
    %6 = arith.subf %cst_8, %5 : f32
    %7 = vector.broadcast %6 : f32 to vector<8x128xf32>
    %8 = arith.maximumf %7, %4 : vector<8x128xf32>
    %9 = vector.broadcast %5 : f32 to vector<8x128xf32>
    %10 = arith.minimumf %9, %8 : vector<8x128xf32>
    %11 = arith.subf %4, %10 : vector<8x128xf32>
    %c0_9 = arith.constant 0 : index
    %c0_10 = arith.constant 0 : index
    %c0_11 = arith.constant 0 : index
    %12 = vector.load %arg5[%c0_9, %c0_10, %c0_11] : memref<4x8x128xf32, #tpu.memory_space<vmem>>, vector<1x8x128xf32>
    %13 = vector.shape_cast %12 : vector<1x8x128xf32> to vector<8x128xf32>
    %14 = vector.shape_cast %11 : vector<8x128xf32> to vector<1x8x128xf32>
    tpu.vector_store %arg5[%c0_9, %c0_10, %c0_11], %14 {strides = array<i32>} : memref<4x8x128xf32, #tpu.memory_space<vmem>>, vector<1x8x128xf32>,
    %c0_12 = arith.constant 0 : index
    %c0_13 = arith.constant 0 : index
    %15 = vector.load %arg7[%c0_12, %c0_13] : memref<8x128xf32, #tpu.memory_space<vmem>>, vector<8x128xf32>
    tpu.vector_store %arg7[%c0_12, %c0_13], %11 {strides = array<i32>} : memref<8x128xf32, #tpu.memory_space<vmem>>, vector<8x128xf32>,
    %c0_14 = arith.constant 0 : index
    %c0_15 = arith.constant 0 : index
    %16 = vector.load %arg6[%c0_14, %c0_15] : memref<8x128xf32, #tpu.memory_space<vmem>>, vector<8x128xf32>
    %c0_16 = arith.constant 0 : index
    %c0_17 = arith.constant 0 : index
    %17 = vector.load %arg7[%c0_16, %c0_17] : memref<8x128xf32, #tpu.memory_space<vmem>>, vector<8x128xf32>
    %c0_18 = arith.constant 0 : index
    %c0_19 = arith.constant 0 : index
    %18 = vector.load %arg4[%c0_18, %c0_19] : memref<128x128xf32, #tpu.memory_space<vmem>>, vector<128x128xf32>
    %cst_20 = arith.constant dense<0.000000e+00> : vector<8x128xf32>
    %19 = tpu.matmul %17, %18, %cst_20 {dimension_numbers = #tpu.dot_dimension_numbers<[1], [0], [0], [1], [0, 0, 1, 1], [], []>} : vector<8x128xf32>, vector<128x128xf32>, vector<8x128xf32> -> vector<8x128xf32>
    %20 = arith.addf %16, %19 : vector<8x128xf32>
    %c1 = arith.constant 1 : index
    %21 = memref.load %arg1[%c1] : memref<4xf32, #tpu.memory_space<smem>>
    %cst_21 = arith.constant 0.000000e+00 : f32
    %22 = arith.subf %cst_21, %21 : f32
    %23 = vector.broadcast %22 : f32 to vector<8x128xf32>
    %24 = arith.maximumf %23, %20 : vector<8x128xf32>
    %25 = vector.broadcast %21 : f32 to vector<8x128xf32>
    %26 = arith.minimumf %25, %24 : vector<8x128xf32>
    %27 = arith.subf %20, %26 : vector<8x128xf32>
    %c1_22 = arith.constant 1 : index
    %c0_23 = arith.constant 0 : index
    %c0_24 = arith.constant 0 : index
    %28 = vector.load %arg5[%c1_22, %c0_23, %c0_24] : memref<4x8x128xf32, #tpu.memory_space<vmem>>, vector<1x8x128xf32>
    %29 = vector.shape_cast %28 : vector<1x8x128xf32> to vector<8x128xf32>
    %30 = vector.shape_cast %27 : vector<8x128xf32> to vector<1x8x128xf32>
    tpu.vector_store %arg5[%c1_22, %c0_23, %c0_24], %30 {strides = array<i32>} : memref<4x8x128xf32, #tpu.memory_space<vmem>>, vector<1x8x128xf32>,
    %c0_25 = arith.constant 0 : index
    %c0_26 = arith.constant 0 : index
    %31 = vector.load %arg7[%c0_25, %c0_26] : memref<8x128xf32, #tpu.memory_space<vmem>>, vector<8x128xf32>
    tpu.vector_store %arg7[%c0_25, %c0_26], %27 {strides = array<i32>} : memref<8x128xf32, #tpu.memory_space<vmem>>, vector<8x128xf32>,
    %c0_27 = arith.constant 0 : index
    %c0_28 = arith.constant 0 : index
    %32 = vector.load %arg6[%c0_27, %c0_28] : memref<8x128xf32, #tpu.memory_space<vmem>>, vector<8x128xf32>
    %c0_29 = arith.constant 0 : index
    %c0_30 = arith.constant 0 : index
    %33 = vector.load %arg7[%c0_29, %c0_30] : memref<8x128xf32, #tpu.memory_space<vmem>>, vector<8x128xf32>
    %c0_31 = arith.constant 0 : index
    %c0_32 = arith.constant 0 : index
    %34 = vector.load %arg4[%c0_31, %c0_32] : memref<128x128xf32, #tpu.memory_space<vmem>>, vector<128x128xf32>
    %cst_33 = arith.constant dense<0.000000e+00> : vector<8x128xf32>
    %35 = tpu.matmul %33, %34, %cst_33 {dimension_numbers = #tpu.dot_dimension_numbers<[1], [0], [0], [1], [0, 0, 1, 1], [], []>} : vector<8x128xf32>, vector<128x128xf32>, vector<8x128xf32> -> vector<8x128xf32>
    %36 = arith.addf %32, %35 : vector<8x128xf32>
    %c2 = arith.constant 2 : index
    %37 = memref.load %arg1[%c2] : memref<4xf32, #tpu.memory_space<smem>>
    %cst_34 = arith.constant 0.000000e+00 : f32
    %38 = arith.subf %cst_34, %37 : f32
    %39 = vector.broadcast %38 : f32 to vector<8x128xf32>
    %40 = arith.maximumf %39, %36 : vector<8x128xf32>
    %41 = vector.broadcast %37 : f32 to vector<8x128xf32>
    %42 = arith.minimumf %41, %40 : vector<8x128xf32>
    %43 = arith.subf %36, %42 : vector<8x128xf32>
    %c2_35 = arith.constant 2 : index
    %c0_36 = arith.constant 0 : index
    %c0_37 = arith.constant 0 : index
    %44 = vector.load %arg5[%c2_35, %c0_36, %c0_37] : memref<4x8x128xf32, #tpu.memory_space<vmem>>, vector<1x8x128xf32>
    %45 = vector.shape_cast %44 : vector<1x8x128xf32> to vector<8x128xf32>
    %46 = vector.shape_cast %43 : vector<8x128xf32> to vector<1x8x128xf32>
    tpu.vector_store %arg5[%c2_35, %c0_36, %c0_37], %46 {strides = array<i32>} : memref<4x8x128xf32, #tpu.memory_space<vmem>>, vector<1x8x128xf32>,
    %c0_38 = arith.constant 0 : index
    %c0_39 = arith.constant 0 : index
    %47 = vector.load %arg7[%c0_38, %c0_39] : memref<8x128xf32, #tpu.memory_space<vmem>>, vector<8x128xf32>
    tpu.vector_store %arg7[%c0_38, %c0_39], %43 {strides = array<i32>} : memref<8x128xf32, #tpu.memory_space<vmem>>, vector<8x128xf32>,
    %c0_40 = arith.constant 0 : index
    %c0_41 = arith.constant 0 : index
    %48 = vector.load %arg6[%c0_40, %c0_41] : memref<8x128xf32, #tpu.memory_space<vmem>>, vector<8x128xf32>
    %c0_42 = arith.constant 0 : index
    %c0_43 = arith.constant 0 : index
    %49 = vector.load %arg7[%c0_42, %c0_43] : memref<8x128xf32, #tpu.memory_space<vmem>>, vector<8x128xf32>
    %c0_44 = arith.constant 0 : index
    %c0_45 = arith.constant 0 : index
    %50 = vector.load %arg4[%c0_44, %c0_45] : memref<128x128xf32, #tpu.memory_space<vmem>>, vector<128x128xf32>
    %cst_46 = arith.constant dense<0.000000e+00> : vector<8x128xf32>
    %51 = tpu.matmul %49, %50, %cst_46 {dimension_numbers = #tpu.dot_dimension_numbers<[1], [0], [0], [1], [0, 0, 1, 1], [], []>} : vector<8x128xf32>, vector<128x128xf32>, vector<8x128xf32> -> vector<8x128xf32>
    %52 = arith.addf %48, %51 : vector<8x128xf32>
    %c3 = arith.constant 3 : index
    %53 = memref.load %arg1[%c3] : memref<4xf32, #tpu.memory_space<smem>>
    %cst_47 = arith.constant 0.000000e+00 : f32
    %54 = arith.subf %cst_47, %53 : f32
    %55 = vector.broadcast %54 : f32 to vector<8x128xf32>
    %56 = arith.maximumf %55, %52 : vector<8x128xf32>
    %57 = vector.broadcast %53 : f32 to vector<8x128xf32>
    %58 = arith.minimumf %57, %56 : vector<8x128xf32>
    %59 = arith.subf %52, %58 : vector<8x128xf32>
    %c3_48 = arith.constant 3 : index
    %c0_49 = arith.constant 0 : index
    %c0_50 = arith.constant 0 : index
    %60 = vector.load %arg5[%c3_48, %c0_49, %c0_50] : memref<4x8x128xf32, #tpu.memory_space<vmem>>, vector<1x8x128xf32>
    %61 = vector.shape_cast %60 : vector<1x8x128xf32> to vector<8x128xf32>
    %62 = vector.shape_cast %59 : vector<8x128xf32> to vector<1x8x128xf32>
    tpu.vector_store %arg5[%c3_48, %c0_49, %c0_50], %62 {strides = array<i32>} : memref<4x8x128xf32, #tpu.memory_space<vmem>>, vector<1x8x128xf32>,
    return
  }
  func.func @transform_0(%arg0: i32) -> i32 {
    %c0_i32 = arith.constant 0 : i32
    %c0_i32_0 = arith.constant 0 : i32
    return %c0_i32 : i32
  }
  func.func @transform_1(%arg0: i32) -> (i32, i32) {
    %c0_i32 = arith.constant 0 : i32
    %c0_i32_0 = arith.constant 0 : i32
    return %arg0, %c0_i32 : i32, i32
  }
  func.func @transform_2(%arg0: i32) -> (i32, i32) {
    %c0_i32 = arith.constant 0 : i32
    %c0_i32_0 = arith.constant 0 : i32
    %c0_i32_1 = arith.constant 0 : i32
    return %c0_i32, %c0_i32_0 : i32, i32
  }
  func.func @transform_3(%arg0: i32) -> (i32, i32) {
    %c0_i32 = arith.constant 0 : i32
    %c0_i32_0 = arith.constant 0 : i32
    %c0_i32_1 = arith.constant 0 : i32
    return %c0_i32, %c0_i32_0 : i32, i32
  }
  func.func @transform_4(%arg0: i32) -> (i32, i32, i32) {
    %c0_i32 = arith.constant 0 : i32
    %c0_i32_0 = arith.constant 0 : i32
    %c0_i32_1 = arith.constant 0 : i32
    return %c0_i32, %arg0, %c0_i32_0 : i32, i32, i32
  }
}

</mosaic_0001>

<llo_original>
// kernel: tpu_custom_call.1
$region0: #{tpu_custom_call.1}
  #allocation0 [shape = 'u32[]', space=smem, size = 0x4, offset = 0x4, fixed_abs, tag = 'smem constant byte address 0x4 - core index']
  #allocation1 [shape = 'u32[144,128]{1,0:T(1,128)}', space=vmem, size = 0x12000, scoped, tag = 'internal scratch']
  #allocation2 [shape = 'f32[8,128]{1,0:T(8,128)}', space=vmem, size = 0x1000, scoped, tag = 'scratch operand']
  #allocation3 [shape = 'f32[8,128]{1,0:T(8,128)}', space=vmem, size = 0x1000, scoped, tag = 'scratch operand']
  %s0 = inlined_call_operand.hbm [shape: f32[4], index: 0, kind: input, shape index: {}]
  %s1 = inlined_call_operand.hbm [shape: f32[8,128], index: 1, kind: input, shape index: {}]
  %s2 = inlined_call_operand.hbm [shape: f32[128,128], index: 2, kind: input, shape index: {}]
  %s3 = inlined_call_operand.hbm [shape: f32[128,128], index: 3, kind: input, shape index: {}]
  %s4 = inlined_call_operand.hbm [shape: f32[4,8,128], index: 4, kind: output, shape index: {}]
  %s5 = sld [smem:[#allocation0]]
  $region42: #{tpu_custom_call.1} parent=0
    _
  %s7 = ssub.s32 1, %s5
  %s8 = scalar_select 0, %s7, %s5
  $region1: #{tpu_custom_call.1} parent=0
    #allocation4 [shape = 'u8[512]{0}', space=smem, size = 0x200, scoped, tag = 'input window, operand 0, single buffered']
    #allocation5 [shape = 's32[1]{0}', space=sflag, size = 0x4, scoped, tag = 'scoped memory for tpu_custom_call.1']
    #allocation6 [shape = 's32[1]{0}', space=sflag, size = 0x4, scoped, tag = 'scoped memory for tpu_custom_call.1']
    #allocation7 [shape = 's32[1]{0}', space=sflag, size = 0x4, scoped, tag = 'scoped memory for tpu_custom_call.1']
    #allocation8 [shape = 'u8[4096]{0}', space=vmem, size = 0x1000, scoped, tag = 'input window, operand 1, single buffered']
    #allocation9 [shape = 'u8[65536]{0}', space=vmem, size = 0x10000, scoped, tag = 'input window, operand 2, single buffered']
    #allocation10 [shape = 's32[1]{0}', space=sflag, size = 0x4, scoped, tag = 'scoped memory for tpu_custom_call.1']
    #allocation11 [shape = 'u8[65536]{0}', space=vmem, size = 0x10000, scoped, tag = 'input window, operand 3, single buffered']
    #allocation12 [shape = 'u8[16384]{0}', space=vmem, size = 0x4000, scoped, tag = 'output window, operand 0, single buffered']
    %9 = vsyncpa [#allocation7], 0
    %10 = vsyncpa [#allocation5], 0
    %11 = vsyncpa [#allocation10], 0
    %12 = vsyncpa [#allocation6], 0
    // Predicated region
    $region2: #{tpu_custom_call.1} parent=1 // pred_check
      _
    $region3: #{tpu_custom_call.1} parent=1 // pred_check_branch
      %14 = sbr.rel (0) target = $region5
    $region4: #{tpu_custom_call.1} parent=1 // pred_region
      %s16 = ssub.s32 16, 16
      %17 = vsyncadd [#allocation7], %s16
      %20 = dma.hbm_to_smem %s0, 16, [#allocation4], [#allocation7]
    $region5: #{tpu_custom_call.1} parent=1 // pred_fallthru
      _
    // Predicated region
    $region6: #{tpu_custom_call.1} parent=1 // pred_check
      _
    $region7: #{tpu_custom_call.1} parent=1 // pred_check_branch
      %22 = sbr.rel (0) target = $region9
    $region8: #{tpu_custom_call.1} parent=1 // pred_region
      %s24 = ssub.s32 128, 128
      %25 = vsyncadd [#allocation5], %s24
      %s27 = sshll.u32 [#allocation8], 4
      %s28 = int_to_ptr.vmem [resolvable:$true] %s27
      %30 = dma.hbm_to_vmem [thread:$0]  %s1, 128, %s28, [#allocation5]
    $region9: #{tpu_custom_call.1} parent=1 // pred_fallthru
      _
    // Predicated region
    $region10: #{tpu_custom_call.1} parent=1 // pred_check
      _
    $region11: #{tpu_custom_call.1} parent=1 // pred_check_branch
      %32 = sbr.rel (0) target = $region13
    $region12: #{tpu_custom_call.1} parent=1 // pred_region
      %s34 = ssub.s32 2048, 2048
      %35 = vsyncadd [#allocation10], %s34
      %s36 = sshll.u32 [#allocation9], 4
      %s37 = int_to_ptr.vmem [resolvable:$true] %s36
      %42 = dma.hbm_to_vmem [thread:$0]  %s2, 2048, %s37, [#allocation10], 128, 128, 8
    $region13: #{tpu_custom_call.1} parent=1 // pred_fallthru
      _
    // Predicated region
    $region14: #{tpu_custom_call.1} parent=1 // pred_check
      _
    $region15: #{tpu_custom_call.1} parent=1 // pred_check_branch
      %44 = sbr.rel (0) target = $region17
    $region16: #{tpu_custom_call.1} parent=1 // pred_region
      %s46 = ssub.s32 2048, 2048
      %47 = vsyncadd [#allocation10], %s46
      %s48 = sshll.u32 [#allocation11], 4
      %s49 = int_to_ptr.vmem [resolvable:$true] %s48
      %54 = dma.hbm_to_vmem [thread:$0]  %s3, 2048, %s49, [#allocation10], 128, 128, 8
    $region17: #{tpu_custom_call.1} parent=1 // pred_fallthru
      _
    // Predicated region
    $region18: #{tpu_custom_call.1} parent=1 // pred_check
      _
    $region19: #{tpu_custom_call.1} parent=1 // pred_check_branch
      %56 = sbr.rel (0) target = $region21
    $region20: #{tpu_custom_call.1} parent=1 // pred_region
      %57 = dma.done [#allocation7], 16
    $region21: #{tpu_custom_call.1} parent=1 // pred_fallthru
      _
    // Predicated region
    $region22: #{tpu_custom_call.1} parent=1 // pred_check
      _
    $region23: #{tpu_custom_call.1} parent=1 // pred_check_branch
      %59 = sbr.rel (0) target = $region25
    $region24: #{tpu_custom_call.1} parent=1 // pred_region
      %60 = dma.done [#allocation5], 128
    $region25: #{tpu_custom_call.1} parent=1 // pred_fallthru
      _
    // Predicated region
    $region26: #{tpu_custom_call.1} parent=1 // pred_check
      _
    $region27: #{tpu_custom_call.1} parent=1 // pred_check_branch
      %62 = sbr.rel (0) target = $region29
    $region28: #{tpu_custom_call.1} parent=1 // pred_region
      %63 = dma.done [#allocation10], 2048
    $region29: #{tpu_custom_call.1} parent=1 // pred_fallthru
      _
    // Predicated region
    $region30: #{tpu_custom_call.1} parent=1 // pred_check
      _
    $region31: #{tpu_custom_call.1} parent=1 // pred_check_branch
      %65 = sbr.rel (0) target = $region33
    $region32: #{tpu_custom_call.1} parent=1 // pred_region
      %66 = dma.done [#allocation10], 2048
    $region33: #{tpu_custom_call.1} parent=1 // pred_fallthru
      _
    %67 = sfence
    %v68 = vld [vmem:[#allocation8] sm:$0xff]
    %v69 = vld [vmem:[#allocation9] sm:$0xff]
    %v70 = vld [vmem:[#allocation9 + $0x8] sm:$0xff]
    %v71 = vld [vmem:[#allocation9 + $0x10] sm:$0xff]
    %v72 = vld [vmem:[#allocation9 + $0x18] sm:$0xff]
    %v73 = vld [vmem:[#allocation9 + $0x20] sm:$0xff]
    %v74 = vld [vmem:[#allocation9 + $0x28] sm:$0xff]
    %v75 = vld [vmem:[#allocation9 + $0x30] sm:$0xff]
    %v76 = vld [vmem:[#allocation9 + $0x38] sm:$0xff]
    %v77 = vld [vmem:[#allocation9 + $0x40] sm:$0xff]
    %v78 = vld [vmem:[#allocation9 + $0x48] sm:$0xff]
    %v79 = vld [vmem:[#allocation9 + $0x50] sm:$0xff]
    %v80 = vld [vmem:[#allocation9 + $0x58] sm:$0xff]
    %v81 = vld [vmem:[#allocation9 + $0x60] sm:$0xff]
    %v82 = vld [vmem:[#allocation9 + $0x68] sm:$0xff]
    %v83 = vld [vmem:[#allocation9 + $0x70] sm:$0xff]
    %v84 = vld [vmem:[#allocation9 + $0x78] sm:$0xff]
    %85 = vmatprep.subr.mxu0 0.0
    %86 = vmatpush1.msra.mxu0 %v69
    %87 = vmatprep.subr.mxu0 0.0
    %88 = vmatpush1.msra.mxu0 %v70
    %89 = vmatprep.subr.mxu0 0.0
    %90 = vmatpush1.msra.mxu0 %v71
    %91 = vmatprep.subr.mxu0 0.0
    %92 = vmatpush1.msra.mxu0 %v72
    %93 = vmatprep.subr.mxu0 0.0
    %94 = vmatpush1.msra.mxu0 %v73
    %95 = vmatprep.subr.mxu0 0.0
    %96 = vmatpush1.msra.mxu0 %v74
    %97 = vmatprep.subr.mxu0 0.0
    %98 = vmatpush1.msra.mxu0 %v75
    %99 = vmatprep.subr.mxu0 0.0
    %100 = vmatpush1.msra.mxu0 %v76
    %101 = vmatprep.subr.mxu0 0.0
    %102 = vmatpush1.msra.mxu0 %v77
    %103 = vmatprep.subr.mxu0 0.0
    %104 = vmatpush1.msra.mxu0 %v78
    %105 = vmatprep.subr.mxu0 0.0
    %106 = vmatpush1.msra.mxu0 %v79
    %107 = vmatprep.subr.mxu0 0.0
    %108 = vmatpush1.msra.mxu0 %v80
    %109 = vmatprep.subr.mxu0 0.0
    %110 = vmatpush1.msra.mxu0 %v81
    %111 = vmatprep.subr.mxu0 0.0
    %112 = vmatpush1.msra.mxu0 %v82
    %113 = vmatprep.subr.mxu0 0.0
    %114 = vmatpush1.msra.mxu0 %v83
    %115 = vmatprep.subr.mxu0 0.0
    %116 = vmatpush1.msra.mxu0 %v84
    %117 = vmatprep.subr.mxu0 0.0
    %118 = vmatpush1.msra.mxu0 0.0
    %119 = vmatprep.subr.mxu0 0.0
    %120 = vmatpush1.msra.mxu0 0.0
    %121 = vmatprep.subr.mxu0 0.0
    %122 = vmatpush1.msra.mxu0 0.0
    %123 = vmatprep.subr.mxu0 0.0
    %124 = vmatpush1.msra.mxu0 0.0
    %125 = vmatprep.subr.mxu0 0.0
    %126 = vmatpush1.msra.mxu0 0.0
    %127 = vmatprep.subr.mxu0 0.0
    %128 = vmatpush1.msra.mxu0 0.0
    %129 = vmatprep.subr.mxu0 0.0
    %130 = vmatpush1.msra.mxu0 0.0
    %131 = vmatprep.subr.mxu0 0.0
    %132 = vmatpush1.msra.mxu0 0.0
    %133 = vmatprep.subr.mxu0 0.0
    %134 = vmatpush1.msra.mxu0 0.0
    %135 = vmatprep.subr.mxu0 0.0
    %136 = vmatpush1.msra.mxu0 0.0
    %137 = vmatprep.subr.mxu0 0.0
    %138 = vmatpush1.msra.mxu0 0.0
    %139 = vmatprep.subr.mxu0 0.0
    %140 = vmatpush1.msra.mxu0 0.0
    %141 = vmatprep.subr.mxu0 0.0
    %142 = vmatpush1.msra.mxu0 0.0
    %143 = vmatprep.subr.mxu0 0.0
    %144 = vmatpush1.msra.mxu0 0.0
    %145 = vmatprep.subr.mxu0 0.0
    %146 = vmatpush1.msra.mxu0 0.0
    %147 = vmatprep.subr.mxu0 0.0
    %148 = vmatpush1.msra.mxu0 0.0
    %149 = vmatprep.mubr.f32.mxu0 0.0
    %150 = vmatmul.mubr.f32.gmra.mrb[0].mxu0 %v68
    %v151 = vpop.f32.mrb[0].mxu0
    %v152 = vadd.f32 0.0, %v151
    %v153 = vpop.f32.mrb[0].mxu0
    %154 = vdwg.mxu0
    %155 = vst [vmem:[#allocation2] sm:$0xff] %v152
    %v156 = vld [vmem:[#allocation2] sm:$0xff]
    %s157 = sld [smem:[#allocation4]]
    %s158 = ssub.f32 0.0, %s157
    %v159 = vstv %s158
    %v160 = vmax.f32 %v159, %v156
    %v161 = vstv %s157
    %v162 = vmin.f32 %v161, %v160
    %v163 = vsub.f32 %v156, %v162
    %164 = vst [vmem:[#allocation12] sm:$0xff] %v163
    %165 = vst [vmem:[#allocation3] sm:$0xff] %v163
    %v166 = vld [vmem:[#allocation2] sm:$0xff]
    %v167 = vld [vmem:[#allocation3] sm:$0xff]
    %v168 = vld [vmem:[#allocation11] sm:$0xff]
    %v169 = vld [vmem:[#allocation11 + $0x8] sm:$0xff]
    %v170 = vld [vmem:[#allocation11 + $0x10] sm:$0xff]
    %v171 = vld [vmem:[#allocation11 + $0x18] sm:$0xff]
    %v172 = vld [vmem:[#allocation11 + $0x20] sm:$0xff]
    %v173 = vld [vmem:[#allocation11 + $0x28] sm:$0xff]
    %v174 = vld [vmem:[#allocation11 + $0x30] sm:$0xff]
    %v175 = vld [vmem:[#allocation11 + $0x38] sm:$0xff]
    %v176 = vld [vmem:[#allocation11 + $0x40] sm:$0xff]
    %v177 = vld [vmem:[#allocation11 + $0x48] sm:$0xff]
    %v178 = vld [vmem:[#allocation11 + $0x50] sm:$0xff]
    %v179 = vld [vmem:[#allocation11 + $0x58] sm:$0xff]
    %v180 = vld [vmem:[#allocation11 + $0x60] sm:$0xff]
    %v181 = vld [vmem:[#allocation11 + $0x68] sm:$0xff]
    %v182 = vld [vmem:[#allocation11 + $0x70] sm:$0xff]
    %v183 = vld [vmem:[#allocation11 + $0x78] sm:$0xff]
    %184 = vmatprep.subr.mxu0 0.0
    %185 = vmatpush1.msra.mxu0 %v168
    %186 = vmatprep.subr.mxu0 0.0
    %187 = vmatpush1.msra.mxu0 %v169
    %188 = vmatprep.subr.mxu0 0.0
    %189 = vmatpush1.msra.mxu0 %v170
    %190 = vmatprep.subr.mxu0 0.0
    %191 = vmatpush1.msra.mxu0 %v171
    %192 = vmatprep.subr.mxu0 0.0
    %193 = vmatpush1.msra.mxu0 %v172
    %194 = vmatprep.subr.mxu0 0.0
    %195 = vmatpush1.msra.mxu0 %v173
    %196 = vmatprep.subr.mxu0 0.0
    %197 = vmatpush1.msra.mxu0 %v174
    %198 = vmatprep.subr.mxu0 0.0
    %199 = vmatpush1.msra.mxu0 %v175
    %200 = vmatprep.subr.mxu0 0.0
    %201 = vmatpush1.msra.mxu0 %v176
    %202 = vmatprep.subr.mxu0 0.0
    %203 = vmatpush1.msra.mxu0 %v177
    %204 = vmatprep.subr.mxu0 0.0
    %205 = vmatpush1.msra.mxu0 %v178
    %206 = vmatprep.subr.mxu0 0.0
    %207 = vmatpush1.msra.mxu0 %v179
    %208 = vmatprep.subr.mxu0 0.0
    %209 = vmatpush1.msra.mxu0 %v180
    %210 = vmatprep.subr.mxu0 0.0
    %211 = vmatpush1.msra.mxu0 %v181
    %212 = vmatprep.subr.mxu0 0.0
    %213 = vmatpush1.msra.mxu0 %v182
    %214 = vmatprep.subr.mxu0 0.0
    %215 = vmatpush1.msra.mxu0 %v183
    %216 = vmatprep.subr.mxu0 0.0
    %217 = vmatpush1.msra.mxu0 0.0
    %218 = vmatprep.subr.mxu0 0.0
    %219 = vmatpush1.msra.mxu0 0.0
    %220 = vmatprep.subr.mxu0 0.0
    %221 = vmatpush1.msra.mxu0 0.0
    %222 = vmatprep.subr.mxu0 0.0
    %223 = vmatpush1.msra.mxu0 0.0
    %224 = vmatprep.subr.mxu0 0.0
    %225 = vmatpush1.msra.mxu0 0.0
    %226 = vmatprep.subr.mxu0 0.0
    %227 = vmatpush1.msra.mxu0 0.0
    %228 = vmatprep.subr.mxu0 0.0
    %229 = vmatpush1.msra.mxu0 0.0
    %230 = vmatprep.subr.mxu0 0.0
    %231 = vmatpush1.msra.mxu0 0.0
    %232 = vmatprep.subr.mxu0 0.0
    %233 = vmatpush1.msra.mxu0 0.0
    %234 = vmatprep.subr.mxu0 0.0
    %235 = vmatpush1.msra.mxu0 0.0
    %236 = vmatprep.subr.mxu0 0.0
    %237 = vmatpush1.msra.mxu0 0.0
    %238 = vmatprep.subr.mxu0 0.0
    %239 = vmatpush1.msra.mxu0 0.0
    %240 = vmatprep.subr.mxu0 0.0
    %241 = vmatpush1.msra.mxu0 0.0
    %242 = vmatprep.subr.mxu0 0.0
    %243 = vmatpush1.msra.mxu0 0.0
    %244 = vmatprep.subr.mxu0 0.0
    %245 = vmatpush1.msra.mxu0 0.0
    %246 = vmatprep.subr.mxu0 0.0
    %247 = vmatpush1.msra.mxu0 0.0
    %248 = vmatprep.mubr.f32.mxu0 0.0
    %249 = vmatmul.mubr.f32.gmra.mrb[0].mxu0 %v167
    %v250 = vpop.f32.mrb[0].mxu0
    %v251 = vadd.f32 0.0, %v250
    %v252 = vpop.f32.mrb[0].mxu0
    %253 = vdwg.mxu0
    %v254 = vadd.f32 %v166, %v251
    %s255 = sld [smem:[#allocation4 + $0x1]]
    %s256 = ssub.f32 0.0, %s255
    %v257 = vstv %s256
    %v258 = vmax.f32 %v257, %v254
    %v259 = vstv %s255
    %v260 = vmin.f32 %v259, %v258
    %v261 = vsub.f32 %v254, %v260
    %s262 = scalar_lea.vmem [#allocation12], 8
    %263 = vst [vmem:[%s262] sm:$0xff] %v261
    %264 = vst [vmem:[#allocation3] sm:$0xff] %v261
    %v265 = vld [vmem:[#allocation2] sm:$0xff]
    %v266 = vld [vmem:[#allocation3] sm:$0xff]
    %v267 = vld [vmem:[#allocation11] sm:$0xff]
    %v268 = vld [vmem:[#allocation11 + $0x8] sm:$0xff]
    %v269 = vld [vmem:[#allocation11 + $0x10] sm:$0xff]
    %v270 = vld [vmem:[#allocation11 + $0x18] sm:$0xff]
    %v271 = vld [vmem:[#allocation11 + $0x20] sm:$0xff]
    %v272 = vld [vmem:[#allocation11 + $0x28] sm:$0xff]
    %v273 = vld [vmem:[#allocation11 + $0x30] sm:$0xff]
    %v274 = vld [vmem:[#allocation11 + $0x38] sm:$0xff]
    %v275 = vld [vmem:[#allocation11 + $0x40] sm:$0xff]
    %v276 = vld [vmem:[#allocation11 + $0x48] sm:$0xff]
    %v277 = vld [vmem:[#allocation11 + $0x50] sm:$0xff]
    %v278 = vld [vmem:[#allocation11 + $0x58] sm:$0xff]
    %v279 = vld [vmem:[#allocation11 + $0x60] sm:$0xff]
    %v280 = vld [vmem:[#allocation11 + $0x68] sm:$0xff]
    %v281 = vld [vmem:[#allocation11 + $0x70] sm:$0xff]
    %v282 = vld [vmem:[#allocation11 + $0x78] sm:$0xff]
    %283 = vmatprep.subr.mxu0 0.0
    %284 = vmatpush1.msra.mxu0 %v267
    %285 = vmatprep.subr.mxu0 0.0
    %286 = vmatpush1.msra.mxu0 %v268
    %287 = vmatprep.subr.mxu0 0.0
    %288 = vmatpush1.msra.mxu0 %v269
    %289 = vmatprep.subr.mxu0 0.0
    %290 = vmatpush1.msra.mxu0 %v270
    %291 = vmatprep.subr.mxu0 0.0
    %292 = vmatpush1.msra.mxu0 %v271
    %293 = vmatprep.subr.mxu0 0.0
    %294 = vmatpush1.msra.mxu0 %v272
    %295 = vmatprep.subr.mxu0 0.0
    %296 = vmatpush1.msra.mxu0 %v273
    %297 = vmatprep.subr.mxu0 0.0
    %298 = vmatpush1.msra.mxu0 %v274
    %299 = vmatprep.subr.mxu0 0.0
    %300 = vmatpush1.msra.mxu0 %v275
    %301 = vmatprep.subr.mxu0 0.0
    %302 = vmatpush1.msra.mxu0 %v276
    %303 = vmatprep.subr.mxu0 0.0
    %304 = vmatpush1.msra.mxu0 %v277
    %305 = vmatprep.subr.mxu0 0.0
    %306 = vmatpush1.msra.mxu0 %v278
    %307 = vmatprep.subr.mxu0 0.0
    %308 = vmatpush1.msra.mxu0 %v279
    %309 = vmatprep.subr.mxu0 0.0
    %310 = vmatpush1.msra.mxu0 %v280
    %311 = vmatprep.subr.mxu0 0.0
    %312 = vmatpush1.msra.mxu0 %v281
    %313 = vmatprep.subr.mxu0 0.0
    %314 = vmatpush1.msra.mxu0 %v282
    %315 = vmatprep.subr.mxu0 0.0
    %316 = vmatpush1.msra.mxu0 0.0
    %317 = vmatprep.subr.mxu0 0.0
    %318 = vmatpush1.msra.mxu0 0.0
    %319 = vmatprep.subr.mxu0 0.0
    %320 = vmatpush1.msra.mxu0 0.0
    %321 = vmatprep.subr.mxu0 0.0
    %322 = vmatpush1.msra.mxu0 0.0
    %323 = vmatprep.subr.mxu0 0.0
    %324 = vmatpush1.msra.mxu0 0.0
    %325 = vmatprep.subr.mxu0 0.0
    %326 = vmatpush1.msra.mxu0 0.0
    %327 = vmatprep.subr.mxu0 0.0
    %328 = vmatpush1.msra.mxu0 0.0
    %329 = vmatprep.subr.mxu0 0.0
    %330 = vmatpush1.msra.mxu0 0.0
    %331 = vmatprep.subr.mxu0 0.0
    %332 = vmatpush1.msra.mxu0 0.0
    %333 = vmatprep.subr.mxu0 0.0
    %334 = vmatpush1.msra.mxu0 0.0
    %335 = vmatprep.subr.mxu0 0.0
    %336 = vmatpush1.msra.mxu0 0.0
    %337 = vmatprep.subr.mxu0 0.0
    %338 = vmatpush1.msra.mxu0 0.0
    %339 = vmatprep.subr.mxu0 0.0
    %340 = vmatpush1.msra.mxu0 0.0
    %341 = vmatprep.subr.mxu0 0.0
    %342 = vmatpush1.msra.mxu0 0.0
    %343 = vmatprep.subr.mxu0 0.0
    %344 = vmatpush1.msra.mxu0 0.0
    %345 = vmatprep.subr.mxu0 0.0
    %346 = vmatpush1.msra.mxu0 0.0
    %347 = vmatprep.mubr.f32.mxu0 0.0
    %348 = vmatmul.mubr.f32.gmra.mrb[0].mxu0 %v266
    %v349 = vpop.f32.mrb[0].mxu0
    %v350 = vadd.f32 0.0, %v349
    %v351 = vpop.f32.mrb[0].mxu0
    %352 = vdwg.mxu0
    %v353 = vadd.f32 %v265, %v350
    %s354 = sld [smem:[#allocation4 + $0x2]]
    %s355 = ssub.f32 0.0, %s354
    %v356 = vstv %s355
    %v357 = vmax.f32 %v356, %v353
    %v358 = vstv %s354
    %v359 = vmin.f32 %v358, %v357
    %v360 = vsub.f32 %v353, %v359
    %s361 = scalar_lea.vmem [#allocation12], 16
    %362 = vst [vmem:[%s361] sm:$0xff] %v360
    %363 = vst [vmem:[#allocation3] sm:$0xff] %v360
    %v364 = vld [vmem:[#allocation2] sm:$0xff]
    %v365 = vld [vmem:[#allocation3] sm:$0xff]
    %v366 = vld [vmem:[#allocation11] sm:$0xff]
    %v367 = vld [vmem:[#allocation11 + $0x8] sm:$0xff]
    %v368 = vld [vmem:[#allocation11 + $0x10] sm:$0xff]
    %v369 = vld [vmem:[#allocation11 + $0x18] sm:$0xff]
    %v370 = vld [vmem:[#allocation11 + $0x20] sm:$0xff]
    %v371 = vld [vmem:[#allocation11 + $0x28] sm:$0xff]
    %v372 = vld [vmem:[#allocation11 + $0x30] sm:$0xff]
    %v373 = vld [vmem:[#allocation11 + $0x38] sm:$0xff]
    %v374 = vld [vmem:[#allocation11 + $0x40] sm:$0xff]
    %v375 = vld [vmem:[#allocation11 + $0x48] sm:$0xff]
    %v376 = vld [vmem:[#allocation11 + $0x50] sm:$0xff]
    %v377 = vld [vmem:[#allocation11 + $0x58] sm:$0xff]
    %v378 = vld [vmem:[#allocation11 + $0x60] sm:$0xff]
    %v379 = vld [vmem:[#allocation11 + $0x68] sm:$0xff]
    %v380 = vld [vmem:[#allocation11 + $0x70] sm:$0xff]
    %v381 = vld [vmem:[#allocation11 + $0x78] sm:$0xff]
    %382 = vmatprep.subr.mxu0 0.0
    %383 = vmatpush1.msra.mxu0 %v366
    %384 = vmatprep.subr.mxu0 0.0
    %385 = vmatpush1.msra.mxu0 %v367
    %386 = vmatprep.subr.mxu0 0.0
    %387 = vmatpush1.msra.mxu0 %v368
    %388 = vmatprep.subr.mxu0 0.0
    %389 = vmatpush1.msra.mxu0 %v369
    %390 = vmatprep.subr.mxu0 0.0
    %391 = vmatpush1.msra.mxu0 %v370
    %392 = vmatprep.subr.mxu0 0.0
    %393 = vmatpush1.msra.mxu0 %v371
    %394 = vmatprep.subr.mxu0 0.0
    %395 = vmatpush1.msra.mxu0 %v372
    %396 = vmatprep.subr.mxu0 0.0
    %397 = vmatpush1.msra.mxu0 %v373
    %398 = vmatprep.subr.mxu0 0.0
    %399 = vmatpush1.msra.mxu0 %v374
    %400 = vmatprep.subr.mxu0 0.0
    %401 = vmatpush1.msra.mxu0 %v375
    %402 = vmatprep.subr.mxu0 0.0
    %403 = vmatpush1.msra.mxu0 %v376
    %404 = vmatprep.subr.mxu0 0.0
    %405 = vmatpush1.msra.mxu0 %v377
    %406 = vmatprep.subr.mxu0 0.0
    %407 = vmatpush1.msra.mxu0 %v378
    %408 = vmatprep.subr.mxu0 0.0
    %409 = vmatpush1.msra.mxu0 %v379
    %410 = vmatprep.subr.mxu0 0.0
    %411 = vmatpush1.msra.mxu0 %v380
    %412 = vmatprep.subr.mxu0 0.0
    %413 = vmatpush1.msra.mxu0 %v381
    %414 = vmatprep.subr.mxu0 0.0
    %415 = vmatpush1.msra.mxu0 0.0
    %416 = vmatprep.subr.mxu0 0.0
    %417 = vmatpush1.msra.mxu0 0.0
    %418 = vmatprep.subr.mxu0 0.0
    %419 = vmatpush1.msra.mxu0 0.0
    %420 = vmatprep.subr.mxu0 0.0
    %421 = vmatpush1.msra.mxu0 0.0
    %422 = vmatprep.subr.mxu0 0.0
    %423 = vmatpush1.msra.mxu0 0.0
    %424 = vmatprep.subr.mxu0 0.0
    %425 = vmatpush1.msra.mxu0 0.0
    %426 = vmatprep.subr.mxu0 0.0
    %427 = vmatpush1.msra.mxu0 0.0
    %428 = vmatprep.subr.mxu0 0.0
    %429 = vmatpush1.msra.mxu0 0.0
    %430 = vmatprep.subr.mxu0 0.0
    %431 = vmatpush1.msra.mxu0 0.0
    %432 = vmatprep.subr.mxu0 0.0
    %433 = vmatpush1.msra.mxu0 0.0
    %434 = vmatprep.subr.mxu0 0.0
    %435 = vmatpush1.msra.mxu0 0.0
    %436 = vmatprep.subr.mxu0 0.0
    %437 = vmatpush1.msra.mxu0 0.0
    %438 = vmatprep.subr.mxu0 0.0
    %439 = vmatpush1.msra.mxu0 0.0
    %440 = vmatprep.subr.mxu0 0.0
    %441 = vmatpush1.msra.mxu0 0.0
    %442 = vmatprep.subr.mxu0 0.0
    %443 = vmatpush1.msra.mxu0 0.0
    %444 = vmatprep.subr.mxu0 0.0
    %445 = vmatpush1.msra.mxu0 0.0
    %446 = vmatprep.mubr.f32.mxu0 0.0
    %447 = vmatmul.mubr.f32.gmra.mrb[0].mxu0 %v365
    %v448 = vpop.f32.mrb[0].mxu0
    %v449 = vadd.f32 0.0, %v448
    %v450 = vpop.f32.mrb[0].mxu0
    %451 = vdwg.mxu0
    %v452 = vadd.f32 %v364, %v449
    %s453 = sld [smem:[#allocation4 + $0x3]]
    %s454 = ssub.f32 0.0, %s453
    %v455 = vstv %s454
    %v456 = vmax.f32 %v455, %v452
    %v457 = vstv %s453
    %v458 = vmin.f32 %v457, %v456
    %v459 = vsub.f32 %v452, %v458
    %s460 = scalar_lea.vmem [#allocation12], 24
    %461 = vst [vmem:[%s460] sm:$0xff] %v459
    // Predicated region
    $region34: #{tpu_custom_call.1} parent=1 // pred_check
      _
    $region35: #{tpu_custom_call.1} parent=1 // pred_check_branch
      %463 = sbr.rel (0) target = $region37
    $region36: #{tpu_custom_call.1} parent=1 // pred_region
      %s465 = ssub.s32 512, 512
      %466 = vsyncadd [#allocation6], %s465
      %s467 = sshll.u32 [#allocation12], 4
      %s468 = int_to_ptr.vmem [resolvable:$true] %s467
      %473 = dma.vmem_to_hbm [thread:$0]  %s468, 512, %s4, [#allocation6], 128, 128, 8
    $region37: #{tpu_custom_call.1} parent=1 // pred_fallthru
      _
    // Predicated region
    $region38: #{tpu_custom_call.1} parent=1 // pred_check
      _
    $region39: #{tpu_custom_call.1} parent=1 // pred_check_branch
      %475 = sbr.rel (0) target = $region41
    $region40: #{tpu_custom_call.1} parent=1 // pred_region
      %476 = dma.done [#allocation6], 512
    $region41: #{tpu_custom_call.1} parent=1 // pred_fallthru
      _
    %477 = vsyncpa [#allocation5], 1
    %478 = vsyncpa [#allocation10], 1
    %479 = vsyncpa [#allocation6], 1
    %480 = vsyncpa [#allocation7], 1

// kernel: tpu_custom_call.1
$region0: #{tpu_custom_call.1}
  #allocation0 [shape = 'u32[]', space=smem, size = 0x4, offset = 0x4, fixed_abs, tag = 'smem constant byte address 0x4 - core index']
  #allocation1 [shape = 'u32[144,128]{1,0:T(1,128)}', space=vmem, size = 0x12000, scoped, tag = 'internal scratch']
  #allocation2 [shape = 'f32[8,128]{1,0:T(8,128)}', space=vmem, size = 0x1000, scoped, tag = 'scratch operand']
  #allocation3 [shape = 'f32[8,128]{1,0:T(8,128)}', space=vmem, size = 0x1000, scoped, tag = 'scratch operand']
  %s0 = inlined_call_operand.hbm [shape: f32[4], index: 0, kind: input, shape index: {}]
  %s1 = inlined_call_operand.hbm [shape: f32[8,128], index: 1, kind: input, shape index: {}]
  %s2 = inlined_call_operand.hbm [shape: f32[128,128], index: 2, kind: input, shape index: {}]
  %s3 = inlined_call_operand.hbm [shape: f32[128,128], index: 3, kind: input, shape index: {}]
  %s4 = inlined_call_operand.hbm [shape: f32[4,8,128], index: 4, kind: output, shape index: {}]
  %s5 = sld [smem:[#allocation0]]
  $region42: #{tpu_custom_call.1} parent=0
    _
  %s7 = ssub.s32 1, %s5
  %s8 = scalar_select 0, %s7, %s5
  $region1: #{tpu_custom_call.1} parent=0
    #allocation4 [shape = 'u8[512]{0}', space=smem, size = 0x200, scoped, tag = 'input window, operand 0, single buffered']
    #allocation5 [shape = 's32[1]{0}', space=sflag, size = 0x4, scoped, tag = 'scoped memory for tpu_custom_call.1']
    #allocation6 [shape = 's32[1]{0}', space=sflag, size = 0x4, scoped, tag = 'scoped memory for tpu_custom_call.1']
    #allocation7 [shape = 's32[1]{0}', space=sflag, size = 0x4, scoped, tag = 'scoped memory for tpu_custom_call.1']
    #allocation8 [shape = 'u8[4096]{0}', space=vmem, size = 0x1000, scoped, tag = 'input window, operand 1, single buffered']
    #allocation9 [shape = 'u8[65536]{0}', space=vmem, size = 0x10000, scoped, tag = 'input window, operand 2, single buffered']
    #allocation10 [shape = 's32[1]{0}', space=sflag, size = 0x4, scoped, tag = 'scoped memory for tpu_custom_call.1']
    #allocation11 [shape = 'u8[65536]{0}', space=vmem, size = 0x10000, scoped, tag = 'input window, operand 3, single buffered']
    #allocation12 [shape = 'u8[16384]{0}', space=vmem, size = 0x4000, scoped, tag = 'output window, operand 0, single buffered']
    %9 = vsyncpa [#allocation7], 0
    %10 = vsyncpa [#allocation5], 0
    %11 = vsyncpa [#allocation10], 0
    %12 = vsyncpa [#allocation6], 0
    // Predicated region
    $region2: #{tpu_custom_call.1} parent=1 // pred_check
      _
    $region3: #{tpu_custom_call.1} parent=1 // pred_check_branch
      %14 = sbr.rel (0) target = $region5
    $region4: #{tpu_custom_call.1} parent=1 // pred_region
      %s16 = ssub.s32 16, 16
      %17 = vsyncadd [#allocation7], %s16
      %20 = dma.hbm_to_smem %s0, 16, [#allocation4], [#allocation7]
    $region5: #{tpu_custom_call.1} parent=1 // pred_fallthru
      _
    // Predicated region
    $region6: #{tpu_custom_call.1} parent=1 // pred_check
      _
    $region7: #{tpu_custom_call.1} parent=1 // pred_check_branch
      %22 = sbr.rel (0) target = $region9
    $region8: #{tpu_custom_call.1} parent=1 // pred_region
      %s24 = ssub.s32 128, 128
      %25 = vsyncadd [#allocation5], %s24
      %s27 = sshll.u32 [#allocation8], 4
      %s28 = int_to_ptr.vmem [resolvable:$true] %s27
      %30 = dma.hbm_to_vmem [thread:$0]  %s1, 128, %s28, [#allocation5]
    $region9: #{tpu_custom_call.1} parent=1 // pred_fallthru
      _
    // Predicated region
    $region10: #{tpu_custom_call.1} parent=1 // pred_check
      _
    $region11: #{tpu_custom_call.1} parent=1 // pred_check_branch
      %32 = sbr.rel (0) target = $region13
    $region12: #{tpu_custom_call.1} parent=1 // pred_region
      %s34 = ssub.s32 2048, 2048
      %35 = vsyncadd [#allocation10], %s34
      %s36 = sshll.u32 [#allocation9], 4
      %s37 = int_to_ptr.vmem [resolvable:$true] %s36
      %42 = dma.hbm_to_vmem [thread:$0]  %s2, 2048, %s37, [#allocation10], 128, 128, 8
    $region13: #{tpu_custom_call.1} parent=1 // pred_fallthru
      _
    // Predicated region
    $region14: #{tpu_custom_call.1} parent=1 // pred_check
      _
    $region15: #{tpu_custom_call.1} parent=1 // pred_check_branch
      %44 = sbr.rel (0) target = $region17
    $region16: #{tpu_custom_call.1} parent=1 // pred_region
      %s46 = ssub.s32 2048, 2048
      %47 = vsyncadd [#allocation10], %s46
      %s48 = sshll.u32 [#allocation11], 4
      %s49 = int_to_ptr.vmem [resolvable:$true] %s48
      %54 = dma.hbm_to_vmem [thread:$0]  %s3, 2048, %s49, [#allocation10], 128, 128, 8
    $region17: #{tpu_custom_call.1} parent=1 // pred_fallthru
      _
    // Predicated region
    $region18: #{tpu_custom_call.1} parent=1 // pred_check
      _
    $region19: #{tpu_custom_call.1} parent=1 // pred_check_branch
      %56 = sbr.rel (0) target = $region21
    $region20: #{tpu_custom_call.1} parent=1 // pred_region
      %57 = dma.done [#allocation7], 16
    $region21: #{tpu_custom_call.1} parent=1 // pred_fallthru
      _
    // Predicated region
    $region22: #{tpu_custom_call.1} parent=1 // pred_check
      _
    $region23: #{tpu_custom_call.1} parent=1 // pred_check_branch
      %59 = sbr.rel (0) target = $region25
    $region24: #{tpu_custom_call.1} parent=1 // pred_region
      %60 = dma.done [#allocation5], 128
    $region25: #{tpu_custom_call.1} parent=1 // pred_fallthru
      _
    // Predicated region
    $region26: #{tpu_custom_call.1} parent=1 // pred_check
      _
    $region27: #{tpu_custom_call.1} parent=1 // pred_check_branch
      %62 = sbr.rel (0) target = $region29
    $region28: #{tpu_custom_call.1} parent=1 // pred_region
      %63 = dma.done [#allocation10], 2048
    $region29: #{tpu_custom_call.1} parent=1 // pred_fallthru
      _
    // Predicated region
    $region30: #{tpu_custom_call.1} parent=1 // pred_check
      _
    $region31: #{tpu_custom_call.1} parent=1 // pred_check_branch
      %65 = sbr.rel (0) target = $region33
    $region32: #{tpu_custom_call.1} parent=1 // pred_region
      %66 = dma.done [#allocation10], 2048
    $region33: #{tpu_custom_call.1} parent=1 // pred_fallthru
      _
    %67 = sfence
    %v68 = vld [vmem:[#allocation8] sm:$0xff]
    %v69 = vld [vmem:[#allocation9] sm:$0xff]
    %v70 = vld [vmem:[#allocation9 + $0x8] sm:$0xff]
    %v71 = vld [vmem:[#allocation9 + $0x10] sm:$0xff]
    %v72 = vld [vmem:[#allocation9 + $0x18] sm:$0xff]
    %v73 = vld [vmem:[#allocation9 + $0x20] sm:$0xff]
    %v74 = vld [vmem:[#allocation9 + $0x28] sm:$0xff]
    %v75 = vld [vmem:[#allocation9 + $0x30] sm:$0xff]
    %v76 = vld [vmem:[#allocation9 + $0x38] sm:$0xff]
    %v77 = vld [vmem:[#allocation9 + $0x40] sm:$0xff]
    %v78 = vld [vmem:[#allocation9 + $0x48] sm:$0xff]
    %v79 = vld [vmem:[#allocation9 + $0x50] sm:$0xff]
    %v80 = vld [vmem:[#allocation9 + $0x58] sm:$0xff]
    %v81 = vld [vmem:[#allocation9 + $0x60] sm:$0xff]
    %v82 = vld [vmem:[#allocation9 + $0x68] sm:$0xff]
    %v83 = vld [vmem:[#allocation9 + $0x70] sm:$0xff]
    %v84 = vld [vmem:[#allocation9 + $0x78] sm:$0xff]
    %85 = vmatprep.subr.mxu0 0.0
    %86 = vmatpush1.msra.mxu0 %v69
    %87 = vmatprep.subr.mxu0 0.0
    %88 = vmatpush1.msra.mxu0 %v70
    %89 = vmatprep.subr.mxu0 0.0
    %90 = vmatpush1.msra.mxu0 %v71
    %91 = vmatprep.subr.mxu0 0.0
    %92 = vmatpush1.msra.mxu0 %v72
    %93 = vmatprep.subr.mxu0 0.0
    %94 = vmatpush1.msra.mxu0 %v73
    %95 = vmatprep.subr.mxu0 0.0
    %96 = vmatpush1.msra.mxu0 %v74
    %97 = vmatprep.subr.mxu0 0.0
    %98 = vmatpush1.msra.mxu0 %v75
    %99 = vmatprep.subr.mxu0 0.0
    %100 = vmatpush1.msra.mxu0 %v76
    %101 = vmatprep.subr.mxu0 0.0
    %102 = vmatpush1.msra.mxu0 %v77
    %103 = vmatprep.subr.mxu0 0.0
    %104 = vmatpush1.msra.mxu0 %v78
    %105 = vmatprep.subr.mxu0 0.0
    %106 = vmatpush1.msra.mxu0 %v79
    %107 = vmatprep.subr.mxu0 0.0
    %108 = vmatpush1.msra.mxu0 %v80
    %109 = vmatprep.subr.mxu0 0.0
    %110 = vmatpush1.msra.mxu0 %v81
    %111 = vmatprep.subr.mxu0 0.0
    %112 = vmatpush1.msra.mxu0 %v82
    %113 = vmatprep.subr.mxu0 0.0
    %114 = vmatpush1.msra.mxu0 %v83
    %115 = vmatprep.subr.mxu0 0.0
    %116 = vmatpush1.msra.mxu0 %v84
    %117 = vmatprep.subr.mxu0 0.0
    %118 = vmatpush1.msra.mxu0 0.0
    %119 = vmatprep.subr.mxu0 0.0
    %120 = vmatpush1.msra.mxu0 0.0
    %121 = vmatprep.subr.mxu0 0.0
    %122 = vmatpush1.msra.mxu0 0.0
    %123 = vmatprep.subr.mxu0 0.0
    %124 = vmatpush1.msra.mxu0 0.0
    %125 = vmatprep.subr.mxu0 0.0
    %126 = vmatpush1.msra.mxu0 0.0
    %127 = vmatprep.subr.mxu0 0.0
    %128 = vmatpush1.msra.mxu0 0.0
    %129 = vmatprep.subr.mxu0 0.0
    %130 = vmatpush1.msra.mxu0 0.0
    %131 = vmatprep.subr.mxu0 0.0
    %132 = vmatpush1.msra.mxu0 0.0
    %133 = vmatprep.subr.mxu0 0.0
    %134 = vmatpush1.msra.mxu0 0.0
    %135 = vmatprep.subr.mxu0 0.0
    %136 = vmatpush1.msra.mxu0 0.0
    %137 = vmatprep.subr.mxu0 0.0
    %138 = vmatpush1.msra.mxu0 0.0
    %139 = vmatprep.subr.mxu0 0.0
    %140 = vmatpush1.msra.mxu0 0.0
    %141 = vmatprep.subr.mxu0 0.0
    %142 = vmatpush1.msra.mxu0 0.0
    %143 = vmatprep.subr.mxu0 0.0
    %144 = vmatpush1.msra.mxu0 0.0
    %145 = vmatprep.subr.mxu0 0.0
    %146 = vmatpush1.msra.mxu0 0.0
    %147 = vmatprep.subr.mxu0 0.0
    %148 = vmatpush1.msra.mxu0 0.0
    %149 = vmatprep.mubr.f32.mxu0 0.0
    %150 = vmatmul.mubr.f32.gmra.mrb[0].mxu0 %v68
    %v151 = vpop.f32.mrb[0].mxu0
    %v152 = vadd.f32 0.0, %v151
    %v153 = vpop.f32.mrb[0].mxu0
    %154 = vdwg.mxu0
    %155 = vst [vmem:[#allocation2] sm:$0xff] %v152
    %v156 = vld [vmem:[#allocation2] sm:$0xff]
    %s157 = sld [smem:[#allocation4]]
    %s158 = ssub.f32 0.0, %s157
    %v159 = vstv %s158
    %v160 = vmax.f32 %v159, %v156
    %v161 = vstv %s157
    %v162 = vmin.f32 %v161, %v160
    %v163 = vsub.f32 %v156, %v162
    %164 = vst [vmem:[#allocation12] sm:$0xff] %v163
    %165 = vst [vmem:[#allocation3] sm:$0xff] %v163
    %v166 = vld [vmem:[#allocation2] sm:$0xff]
    %v167 = vld [vmem:[#allocation3] sm:$0xff]
    %v168 = vld [vmem:[#allocation11] sm:$0xff]
    %v169 = vld [vmem:[#allocation11 + $0x8] sm:$0xff]
    %v170 = vld [vmem:[#allocation11 + $0x10] sm:$0xff]
    %v171 = vld [vmem:[#allocation11 + $0x18] sm:$0xff]
    %v172 = vld [vmem:[#allocation11 + $0x20] sm:$0xff]
    %v173 = vld [vmem:[#allocation11 + $0x28] sm:$0xff]
    %v174 = vld [vmem:[#allocation11 + $0x30] sm:$0xff]
    %v175 = vld [vmem:[#allocation11 + $0x38] sm:$0xff]
    %v176 = vld [vmem:[#allocation11 + $0x40] sm:$0xff]
    %v177 = vld [vmem:[#allocation11 + $0x48] sm:$0xff]
    %v178 = vld [vmem:[#allocation11 + $0x50] sm:$0xff]
    %v179 = vld [vmem:[#allocation11 + $0x58] sm:$0xff]
    %v180 = vld [vmem:[#allocation11 + $0x60] sm:$0xff]
    %v181 = vld [vmem:[#allocation11 + $0x68] sm:$0xff]
    %v182 = vld [vmem:[#allocation11 + $0x70] sm:$0xff]
    %v183 = vld [vmem:[#allocation11 + $0x78] sm:$0xff]
    %184 = vmatprep.subr.mxu0 0.0
    %185 = vmatpush1.msra.mxu0 %v168
    %186 = vmatprep.subr.mxu0 0.0
    %187 = vmatpush1.msra.mxu0 %v169
    %188 = vmatprep.subr.mxu0 0.0
    %189 = vmatpush1.msra.mxu0 %v170
    %190 = vmatprep.subr.mxu0 0.0
    %191 = vmatpush1.msra.mxu0 %v171
    %192 = vmatprep.subr.mxu0 0.0
    %193 = vmatpush1.msra.mxu0 %v172
    %194 = vmatprep.subr.mxu0 0.0
    %195 = vmatpush1.msra.mxu0 %v173
    %196 = vmatprep.subr.mxu0 0.0
    %197 = vmatpush1.msra.mxu0 %v174
    %198 = vmatprep.subr.mxu0 0.0
    %199 = vmatpush1.msra.mxu0 %v175
    %200 = vmatprep.subr.mxu0 0.0
    %201 = vmatpush1.msra.mxu0 %v176
    %202 = vmatprep.subr.mxu0 0.0
    %203 = vmatpush1.msra.mxu0 %v177
    %204 = vmatprep.subr.mxu0 0.0
    %205 = vmatpush1.msra.mxu0 %v178
    %206 = vmatprep.subr.mxu0 0.0
    %207 = vmatpush1.msra.mxu0 %v179
    %208 = vmatprep.subr.mxu0 0.0
    %209 = vmatpush1.msra.mxu0 %v180
    %210 = vmatprep.subr.mxu0 0.0
    %211 = vmatpush1.msra.mxu0 %v181
    %212 = vmatprep.subr.mxu0 0.0
    %213 = vmatpush1.msra.mxu0 %v182
    %214 = vmatprep.subr.mxu0 0.0
    %215 = vmatpush1.msra.mxu0 %v183
    %216 = vmatprep.subr.mxu0 0.0
    %217 = vmatpush1.msra.mxu0 0.0
    %218 = vmatprep.subr.mxu0 0.0
    %219 = vmatpush1.msra.mxu0 0.0
    %220 = vmatprep.subr.mxu0 0.0
    %221 = vmatpush1.msra.mxu0 0.0
    %222 = vmatprep.subr.mxu0 0.0
    %223 = vmatpush1.msra.mxu0 0.0
    %224 = vmatprep.subr.mxu0 0.0
    %225 = vmatpush1.msra.mxu0 0.0
    %226 = vmatprep.subr.mxu0 0.0
    %227 = vmatpush1.msra.mxu0 0.0
    %228 = vmatprep.subr.mxu0 0.0
    %229 = vmatpush1.msra.mxu0 0.0
    %230 = vmatprep.subr.mxu0 0.0
    %231 = vmatpush1.msra.mxu0 0.0
    %232 = vmatprep.subr.mxu0 0.0
    %233 = vmatpush1.msra.mxu0 0.0
    %234 = vmatprep.subr.mxu0 0.0
    %235 = vmatpush1.msra.mxu0 0.0
    %236 = vmatprep.subr.mxu0 0.0
    %237 = vmatpush1.msra.mxu0 0.0
    %238 = vmatprep.subr.mxu0 0.0
    %239 = vmatpush1.msra.mxu0 0.0
    %240 = vmatprep.subr.mxu0 0.0
    %241 = vmatpush1.msra.mxu0 0.0
    %242 = vmatprep.subr.mxu0 0.0
    %243 = vmatpush1.msra.mxu0 0.0
    %244 = vmatprep.subr.mxu0 0.0
    %245 = vmatpush1.msra.mxu0 0.0
    %246 = vmatprep.subr.mxu0 0.0
    %247 = vmatpush1.msra.mxu0 0.0
    %248 = vmatprep.mubr.f32.mxu0 0.0
    %249 = vmatmul.mubr.f32.gmra.mrb[0].mxu0 %v167
    %v250 = vpop.f32.mrb[0].mxu0
    %v251 = vadd.f32 0.0, %v250
    %v252 = vpop.f32.mrb[0].mxu0
    %253 = vdwg.mxu0
    %v254 = vadd.f32 %v166, %v251
    %s255 = sld [smem:[#allocation4 + $0x1]]
    %s256 = ssub.f32 0.0, %s255
    %v257 = vstv %s256
    %v258 = vmax.f32 %v257, %v254
    %v259 = vstv %s255
    %v260 = vmin.f32 %v259, %v258
    %v261 = vsub.f32 %v254, %v260
    %s262 = scalar_lea.vmem [#allocation12], 8
    %263 = vst [vmem:[%s262] sm:$0xff] %v261
    %264 = vst [vmem:[#allocation3] sm:$0xff] %v261
    %v265 = vld [vmem:[#allocation2] sm:$0xff]
    %v266 = vld [vmem:[#allocation3] sm:$0xff]
    %v267 = vld [vmem:[#allocation11] sm:$0xff]
    %v268 = vld [vmem:[#allocation11 + $0x8] sm:$0xff]
    %v269 = vld [vmem:[#allocation11 + $0x10] sm:$0xff]
    %v270 = vld [vmem:[#allocation11 + $0x18] sm:$0xff]
    %v271 = vld [vmem:[#allocation11 + $0x20] sm:$0xff]
    %v272 = vld [vmem:[#allocation11 + $0x28] sm:$0xff]
    %v273 = vld [vmem:[#allocation11 + $0x30] sm:$0xff]
    %v274 = vld [vmem:[#allocation11 + $0x38] sm:$0xff]
    %v275 = vld [vmem:[#allocation11 + $0x40] sm:$0xff]
    %v276 = vld [vmem:[#allocation11 + $0x48] sm:$0xff]
    %v277 = vld [vmem:[#allocation11 + $0x50] sm:$0xff]
    %v278 = vld [vmem:[#allocation11 + $0x58] sm:$0xff]
    %v279 = vld [vmem:[#allocation11 + $0x60] sm:$0xff]
    %v280 = vld [vmem:[#allocation11 + $0x68] sm:$0xff]
    %v281 = vld [vmem:[#allocation11 + $0x70] sm:$0xff]
    %v282 = vld [vmem:[#allocation11 + $0x78] sm:$0xff]
    %283 = vmatprep.subr.mxu0 0.0
    %284 = vmatpush1.msra.mxu0 %v267
    %285 = vmatprep.subr.mxu0 0.0
    %286 = vmatpush1.msra.mxu0 %v268
    %287 = vmatprep.subr.mxu0 0.0
    %288 = vmatpush1.msra.mxu0 %v269
    %289 = vmatprep.subr.mxu0 0.0
    %290 = vmatpush1.msra.mxu0 %v270
    %291 = vmatprep.subr.mxu0 0.0
    %292 = vmatpush1.msra.mxu0 %v271
    %293 = vmatprep.subr.mxu0 0.0
    %294 = vmatpush1.msra.mxu0 %v272
    %295 = vmatprep.subr.mxu0 0.0
    %296 = vmatpush1.msra.mxu0 %v273
    %297 = vmatprep.subr.mxu0 0.0
    %298 = vmatpush1.msra.mxu0 %v274
    %299 = vmatprep.subr.mxu0 0.0
    %300 = vmatpush1.msra.mxu0 %v275
    %301 = vmatprep.subr.mxu0 0.0
    %302 = vmatpush1.msra.mxu0 %v276
    %303 = vmatprep.subr.mxu0 0.0
    %304 = vmatpush1.msra.mxu0 %v277
    %305 = vmatprep.subr.mxu0 0.0
    %306 = vmatpush1.msra.mxu0 %v278
    %307 = vmatprep.subr.mxu0 0.0
    %308 = vmatpush1.msra.mxu0 %v279
    %309 = vmatprep.subr.mxu0 0.0
    %310 = vmatpush1.msra.mxu0 %v280
    %311 = vmatprep.subr.mxu0 0.0
    %312 = vmatpush1.msra.mxu0 %v281
    %313 = vmatprep.subr.mxu0 0.0
    %314 = vmatpush1.msra.mxu0 %v282
    %315 = vmatprep.subr.mxu0 0.0
    %316 = vmatpush1.msra.mxu0 0.0
    %317 = vmatprep.subr.mxu0 0.0
    %318 = vmatpush1.msra.mxu0 0.0
    %319 = vmatprep.subr.mxu0 0.0
    %320 = vmatpush1.msra.mxu0 0.0
    %321 = vmatprep.subr.mxu0 0.0
    %322 = vmatpush1.msra.mxu0 0.0
    %323 = vmatprep.subr.mxu0 0.0
    %324 = vmatpush1.msra.mxu0 0.0
    %325 = vmatprep.subr.mxu0 0.0
    %326 = vmatpush1.msra.mxu0 0.0
    %327 = vmatprep.subr.mxu0 0.0
    %328 = vmatpush1.msra.mxu0 0.0
    %329 = vmatprep.subr.mxu0 0.0
    %330 = vmatpush1.msra.mxu0 0.0
    %331 = vmatprep.subr.mxu0 0.0
    %332 = vmatpush1.msra.mxu0 0.0
    %333 = vmatprep.subr.mxu0 0.0
    %334 = vmatpush1.msra.mxu0 0.0
    %335 = vmatprep.subr.mxu0 0.0
    %336 = vmatpush1.msra.mxu0 0.0
    %337 = vmatprep.subr.mxu0 0.0
    %338 = vmatpush1.msra.mxu0 0.0
    %339 = vmatprep.subr.mxu0 0.0
    %340 = vmatpush1.msra.mxu0 0.0
    %341 = vmatprep.subr.mxu0 0.0
    %342 = vmatpush1.msra.mxu0 0.0
    %343 = vmatprep.subr.mxu0 0.0
    %344 = vmatpush1.msra.mxu0 0.0
    %345 = vmatprep.subr.mxu0 0.0
    %346 = vmatpush1.msra.mxu0 0.0
    %347 = vmatprep.mubr.f32.mxu0 0.0
    %348 = vmatmul.mubr.f32.gmra.mrb[0].mxu0 %v266
    %v349 = vpop.f32.mrb[0].mxu0
    %v350 = vadd.f32 0.0, %v349
    %v351 = vpop.f32.mrb[0].mxu0
    %352 = vdwg.mxu0
    %v353 = vadd.f32 %v265, %v350
    %s354 = sld [smem:[#allocation4 + $0x2]]
    %s355 = ssub.f32 0.0, %s354
    %v356 = vstv %s355
    %v357 = vmax.f32 %v356, %v353
    %v358 = vstv %s354
    %v359 = vmin.f32 %v358, %v357
    %v360 = vsub.f32 %v353, %v359
    %s361 = scalar_lea.vmem [#allocation12], 16
    %362 = vst [vmem:[%s361] sm:$0xff] %v360
    %363 = vst [vmem:[#allocation3] sm:$0xff] %v360
    %v364 = vld [vmem:[#allocation2] sm:$0xff]
    %v365 = vld [vmem:[#allocation3] sm:$0xff]
    %v366 = vld [vmem:[#allocation11] sm:$0xff]
    %v367 = vld [vmem:[#allocation11 + $0x8] sm:$0xff]
    %v368 = vld [vmem:[#allocation11 + $0x10] sm:$0xff]
    %v369 = vld [vmem:[#allocation11 + $0x18] sm:$0xff]
    %v370 = vld [vmem:[#allocation11 + $0x20] sm:$0xff]
    %v371 = vld [vmem:[#allocation11 + $0x28] sm:$0xff]
    %v372 = vld [vmem:[#allocation11 + $0x30] sm:$0xff]
    %v373 = vld [vmem:[#allocation11 + $0x38] sm:$0xff]
    %v374 = vld [vmem:[#allocation11 + $0x40] sm:$0xff]
    %v375 = vld [vmem:[#allocation11 + $0x48] sm:$0xff]
    %v376 = vld [vmem:[#allocation11 + $0x50] sm:$0xff]
    %v377 = vld [vmem:[#allocation11 + $0x58] sm:$0xff]
    %v378 = vld [vmem:[#allocation11 + $0x60] sm:$0xff]
    %v379 = vld [vmem:[#allocation11 + $0x68] sm:$0xff]
    %v380 = vld [vmem:[#allocation11 + $0x70] sm:$0xff]
    %v381 = vld [vmem:[#allocation11 + $0x78] sm:$0xff]
    %382 = vmatprep.subr.mxu0 0.0
    %383 = vmatpush1.msra.mxu0 %v366
    %384 = vmatprep.subr.mxu0 0.0
    %385 = vmatpush1.msra.mxu0 %v367
    %386 = vmatprep.subr.mxu0 0.0
    %387 = vmatpush1.msra.mxu0 %v368
    %388 = vmatprep.subr.mxu0 0.0
    %389 = vmatpush1.msra.mxu0 %v369
    %390 = vmatprep.subr.mxu0 0.0
    %391 = vmatpush1.msra.mxu0 %v370
    %392 = vmatprep.subr.mxu0 0.0
    %393 = vmatpush1.msra.mxu0 %v371
    %394 = vmatprep.subr.mxu0 0.0
    %395 = vmatpush1.msra.mxu0 %v372
    %396 = vmatprep.subr.mxu0 0.0
    %397 = vmatpush1.msra.mxu0 %v373
    %398 = vmatprep.subr.mxu0 0.0
    %399 = vmatpush1.msra.mxu0 %v374
    %400 = vmatprep.subr.mxu0 0.0
    %401 = vmatpush1.msra.mxu0 %v375
    %402 = vmatprep.subr.mxu0 0.0
    %403 = vmatpush1.msra.mxu0 %v376
    %404 = vmatprep.subr.mxu0 0.0
    %405 = vmatpush1.msra.mxu0 %v377
    %406 = vmatprep.subr.mxu0 0.0
    %407 = vmatpush1.msra.mxu0 %v378
    %408 = vmatprep.subr.mxu0 0.0
    %409 = vmatpush1.msra.mxu0 %v379
    %410 = vmatprep.subr.mxu0 0.0
    %411 = vmatpush1.msra.mxu0 %v380
    %412 = vmatprep.subr.mxu0 0.0
    %413 = vmatpush1.msra.mxu0 %v381
    %414 = vmatprep.subr.mxu0 0.0
    %415 = vmatpush1.msra.mxu0 0.0
    %416 = vmatprep.subr.mxu0 0.0
    %417 = vmatpush1.msra.mxu0 0.0
    %418 = vmatprep.subr.mxu0 0.0
    %419 = vmatpush1.msra.mxu0 0.0
    %420 = vmatprep.subr.mxu0 0.0
    %421 = vmatpush1.msra.mxu0 0.0
    %422 = vmatprep.subr.mxu0 0.0
    %423 = vmatpush1.msra.mxu0 0.0
    %424 = vmatprep.subr.mxu0 0.0
    %425 = vmatpush1.msra.mxu0 0.0
    %426 = vmatprep.subr.mxu0 0.0
    %427 = vmatpush1.msra.mxu0 0.0
    %428 = vmatprep.subr.mxu0 0.0
    %429 = vmatpush1.msra.mxu0 0.0
    %430 = vmatprep.subr.mxu0 0.0
    %431 = vmatpush1.msra.mxu0 0.0
    %432 = vmatprep.subr.mxu0 0.0
    %433 = vmatpush1.msra.mxu0 0.0
    %434 = vmatprep.subr.mxu0 0.0
    %435 = vmatpush1.msra.mxu0 0.0
    %436 = vmatprep.subr.mxu0 0.0
    %437 = vmatpush1.msra.mxu0 0.0
    %438 = vmatprep.subr.mxu0 0.0
    %439 = vmatpush1.msra.mxu0 0.0
    %440 = vmatprep.subr.mxu0 0.0
    %441 = vmatpush1.msra.mxu0 0.0
    %442 = vmatprep.subr.mxu0 0.0
    %443 = vmatpush1.msra.mxu0 0.0
    %444 = vmatprep.subr.mxu0 0.0
    %445 = vmatpush1.msra.mxu0 0.0
    %446 = vmatprep.mubr.f32.mxu0 0.0
    %447 = vmatmul.mubr.f32.gmra.mrb[0].mxu0 %v365
    %v448 = vpop.f32.mrb[0].mxu0
    %v449 = vadd.f32 0.0, %v448
    %v450 = vpop.f32.mrb[0].mxu0
    %451 = vdwg.mxu0
    %v452 = vadd.f32 %v364, %v449
    %s453 = sld [smem:[#allocation4 + $0x3]]
    %s454 = ssub.f32 0.0, %s453
    %v455 = vstv %s454
    %v456 = vmax.f32 %v455, %v452
    %v457 = vstv %s453
    %v458 = vmin.f32 %v457, %v456
    %v459 = vsub.f32 %v452, %v458
    %s460 = scalar_lea.vmem [#allocation12], 24
    %461 = vst [vmem:[%s460] sm:$0xff] %v459
    // Predicated region
    $region34: #{tpu_custom_call.1} parent=1 // pred_check
      _
    $region35: #{tpu_custom_call.1} parent=1 // pred_check_branch
      %463 = sbr.rel (0) target = $region37
    $region36: #{tpu_custom_call.1} parent=1 // pred_region
      %s465 = ssub.s32 512, 512
      %466 = vsyncadd [#allocation6], %s465
      %s467 = sshll.u32 [#allocation12], 4
      %s468 = int_to_ptr.vmem [resolvable:$true] %s467
      %473 = dma.vmem_to_hbm [thread:$0]  %s468, 512, %s4, [#allocation6], 128, 128, 8
    $region37: #{tpu_custom_call.1} parent=1 // pred_fallthru
      _
    // Predicated region
    $region38: #{tpu_custom_call.1} parent=1 // pred_check
      _
    $region39: #{tpu_custom_call.1} parent=1 // pred_check_branch
      %475 = sbr.rel (0) target = $region41
    $region40: #{tpu_custom_call.1} parent=1 // pred_region
      %476 = dma.done [#allocation6], 512
    $region41: #{tpu_custom_call.1} parent=1 // pred_fallthru
      _
    %477 = vsyncpa [#allocation5], 1
    %478 = vsyncpa [#allocation10], 1
    %479 = vsyncpa [#allocation6], 1
    %480 = vsyncpa [#allocation7], 1

</llo_original>
